<compile_context>
chip_gen: v7x
topology: tpu7x:2x2x1
jax: 0.10.0
libtpu: 0.0.40
codegen_flags: <defaults>
</compile_context>

<pallas_src>
import functools

import numpy as np
import jax
import jax.numpy as jnp
from jax.experimental import pallas as pl
from jax.experimental.pallas import tpu as pltpu

LEAKY_SLOPE = 0.01   # nn.LeakyReLU default
LN_EPS = 1e-5        # TreeLayerNorm: (x - mean) / (std + 0.00001)


# ----------------------------------------------------------------------------
# prepare_trees (host-side glue, mirrors TreeConvolution.util; not a kernel)
# ----------------------------------------------------------------------------
def features(x):
    return x[0]


def left_child(x):
    if len(x) != 3:
        return None
    return x[1]


def right_child(x):
    if len(x) != 3:
        return None
    return x[2]


def _flatten(tree):
    accum = []

    def rec(t):
        accum.append(np.asarray(features(t), dtype=np.float32))
        if left_child(t) is not None:
            rec(left_child(t))
            rec(right_child(t))

    rec(tree)
    return np.stack([np.zeros_like(accum[0])] + accum)   # zero vector at slot 0


def _preorder_indexes(tree, idx=1):
    if left_child(tree) is None:
        return idx

    def rightmost(x):
        return x if isinstance(x, int) else rightmost(x[2])

    left = _preorder_indexes(left_child(tree), idx + 1)
    right = _preorder_indexes(right_child(tree), rightmost(left) + 1)
    return (idx, left, right)


def _tree_conv_indexes(tree):
    out = []

    def rec(n):
        if isinstance(n, int):
            out.append([n, 0, 0])
        else:
            my, l, r = n
            out.append([my,
                        l if isinstance(l, int) else l[0],
                        r if isinstance(r, int) else r[0]])
            rec(l)
            rec(r)

    rec(_preorder_indexes(tree))
    return np.asarray(out, dtype=np.int32)


def prepare_trees_np(trees):
    flats = [_flatten(t) for t in trees]
    idxs = [_tree_conv_indexes(t) for t in trees]
    np1 = max(f.shape[0] for f in flats)          # max nodes + 1 (zero-vec slot)
    c = flats[0].shape[1]
    x = np.zeros((len(trees), np1, c), np.float32)
    i = np.zeros((len(trees), np1, 3), np.int32)  # padded slots -> [0,0,0] (bias-only)
    i[:, 0, :] = -1                               # sentinel for the zero-vec slot itself
    for b, (f, ix) in enumerate(zip(flats, idxs)):
        x[b, :f.shape[0]] = f
        i[b, 1:1 + ix.shape[0]] = ix
    return x, i


# ----------------------------------------------------------------------------
# Pallas kernel: TB trees per grid step, full BaoNet tree_conv stack (up to pooling)
# ----------------------------------------------------------------------------
def _bao_kernel(x_ref, idx_ref, w1, b1, w2, b2, w3, b3, out_ref, *,
                orig_np1, per_tree):
    TB, NP, CIN = x_ref.shape
    M = TB * NP

    x = x_ref[...].astype(jnp.float32).reshape(M, CIN)      # (M, Cin)
    idx = idx_ref[...]                                       # (TB, 3, NP) int32

    # ---- one-hot gather selectors: built once per block, reused by all three convs ----
    if per_tree:
        # Per-tree batched (TB, NP, NP) selectors; -1 never matches a column in [0, NP).
        col = jax.lax.broadcasted_iota(jnp.int32, (1, 1, NP), 2)      # small; broadcast in cmp
        sel = [(idx[:, k, :][:, :, None] == col).astype(jnp.bfloat16) for k in range(3)]

        def gather(k, v):       # v: (M, C) bf16 -> (M, C) f32 one-hot gather
            c = v.shape[-1]
            g = jnp.einsum("tij,tjc->tic", sel[k], v.reshape(TB, NP, c),
                           preferred_element_type=jnp.float32)
            return g.reshape(M, c)
    else:
        # Block-diagonal (M, M) selectors; rows with idx == -1 match nothing.
        offs = jax.lax.broadcasted_iota(jnp.int32, (TB, NP), 0) * NP  # per-tree row offset
        col = jax.lax.broadcasted_iota(jnp.int32, (1, M), 1)          # small; broadcast in cmp
        sel = [(jnp.where(idx[:, k, :] >= 0, idx[:, k, :] + offs, -1).reshape(M, 1)
                == col).astype(jnp.bfloat16) for k in range(3)]

        def gather(k, v):       # v: (M, C) bf16 -> (M, C) f32
            return jnp.dot(sel[k], v, preferred_element_type=jnp.float32)

    # rows that receive conv output/bias (real + batch-pad rows); the zero-vec slot and
    # node-alignment rows (idx_self == -1) are re-zeroed after every conv, exactly like
    # the reference's prepended zero vector.
    keep = (idx[:, 0, :] >= 0).astype(jnp.float32).reshape(M, 1)      # (M, 1)

    def leaky(v):
        return jnp.where(v > 0.0, v, LEAKY_SLOPE * v)

    def layer_norm(y):
        # per-tree scalar mean/std over the orig_np1 real node slots x all channels
        # (alignment rows are exactly 0 when this runs, so they do not perturb the sums).
        c = y.shape[1]
        cnt = float(orig_np1 * c)
        y3 = y.reshape(TB, NP, c)
        s1 = jnp.sum(y3, axis=(1, 2), keepdims=True)                  # (TB, 1, 1)
        s2 = jnp.sum(y3 * y3, axis=(1, 2), keepdims=True)
        mean = s1 * (1.0 / cnt)
        var = jnp.maximum((s2 - cnt * mean * mean) * (1.0 / (cnt - 1.0)), 0.0)  # unbiased
        inv = pl.reciprocal(jnp.sqrt(var) + LN_EPS, approx=True)
        return ((y3 - mean) * inv).reshape(M, c)

    def conv_pg(h, w_ref, b_ref):
        # project-then-gather; tap slabs land on 128-lane boundaries (Cout in {256, 128}).
        p = jnp.dot(h.astype(jnp.bfloat16), w_ref[...],
                    preferred_element_type=jnp.float32)               # (M, 3*Cout)
        cout = p.shape[1] // 3
        pb = p.astype(jnp.bfloat16)
        # sequential accumulation into a single f32 accumulator
        y = gather(0, pb[:, :cout])
        y = y + gather(1, pb[:, cout:2 * cout])
        y = y + gather(2, pb[:, 2 * cout:])
        return (y + b_ref[...]) * keep

    def conv_gp(h, w_ref, b_ref):
        # gather-then-project (used for 128 -> 64 so no 64-lane-offset slices are needed);
        # w_ref is the row-stacked (3*Cin, Cout) tap matrix.
        hb = h.astype(jnp.bfloat16)
        g = jnp.concatenate([gather(k, hb).astype(jnp.bfloat16) for k in range(3)],
                            axis=1)                                   # (M, 3*128), aligned
        y = jnp.dot(g, w_ref[...], preferred_element_type=jnp.float32)
        return (y + b_ref[...]) * keep

    h = leaky(layer_norm(conv_pg(x, w1, b1)))                         # (M, 256)
    h = leaky(layer_norm(conv_pg(h, w2, b2)))                         # (M, 128)
    h = layer_norm(conv_gp(h, w3, b3))                                # (M, 64)

    # ---- DynamicPooling: per-tree max over the real (unpadded) node slots ------------
    h3 = h.reshape(TB, NP, h.shape[1])
    node_pos = jax.lax.broadcasted_iota(jnp.int32, (TB, NP, 1), 1)
    pooled = jnp.max(jnp.where(node_pos < orig_np1, h3, -jnp.inf), axis=1)   # (TB, 64)
    out_ref[...] = pooled.reshape(1, TB, pooled.shape[1])


def bao_net_forward(trees, idxes, conv_params, head_params, *,
                    max_tb=64, m_target=512):
    """trees: (B, N+1, Cin) f32, idxes: (B, N+1, 3) int32 (row 0 sentinel -1)."""
    trees = jnp.asarray(trees, jnp.float32)
    idxes = jnp.asarray(idxes, jnp.int32)
    B, np1, cin = trees.shape

    # pad node axis to a sublane multiple; padded rows get idx = -1 (never gathered,
    # no bias -> re-zeroed after every conv, excluded from LN counts / pooling).
    NP = ((np1 + 7) // 8) * 8
    if NP > np1:
        trees = jnp.pad(trees, ((0, 0), (0, NP - np1), (0, 0)))
        idxes = jnp.pad(idxes, ((0, 0), (0, NP - np1), (0, 0)), constant_values=-1)

    # Big trees -> per-tree batched selectors (no block-diagonal zero waste).
    per_tree = NP >= 128

    # trees per grid step: target M = TB*NP ~= m_target (bounds selector/activation VMEM
    # and fills MXU rows), then make sure there are >= 2 grid steps so the "parallel"
    # grid axis can shard across both TensorCores on v7x.
    TB = max(1, min(max_tb, max(1, m_target // NP), B))
    if B >= 2:
        TB = min(TB, -(-B // 2))
    Bp = -(-B // TB) * TB
    if Bp > B:   # dummy trees: all idx = -1 -> finite outputs, sliced off below
        trees = jnp.pad(trees, ((0, Bp - B), (0, 0), (0, 0)))
        idxes = jnp.pad(idxes, ((0, Bp - B), (0, 0), (0, 0)), constant_values=-1)
    nblk = Bp // TB

    # node axis onto the 128-lane axis: (B, 3, NP)
    idx_t = jnp.transpose(idxes, (0, 2, 1))

    def wspec(p):
        nd = p.ndim
        return pl.BlockSpec(p.shape, lambda i, nd=nd: (0,) * nd)

    in_specs = [
        pl.BlockSpec((TB, NP, cin), lambda i: (i, 0, 0)),
        pl.BlockSpec((TB, 3, NP), lambda i: (i, 0, 0)),
    ] + [wspec(p) for p in conv_params]

    kernel = functools.partial(_bao_kernel, orig_np1=np1, per_tree=per_tree)

    # TODO(synk): for very large plans (NP > ~2048, TB == 1) chunk the selector row axis
    # so the three (NP, NP) bf16 selectors stay inside v7x's 64 MiB physical VMEM.
    pooled = pl.pallas_call(
        kernel,
        out_shape=jax.ShapeDtypeStruct((nblk, TB, 64), jnp.float32),
        grid=(nblk,),
        in_specs=in_specs,
        out_specs=pl.BlockSpec((1, TB, 64), lambda i: (i, 0, 0)),
        compiler_params=pltpu.CompilerParams(
            dimension_semantics=("parallel",),
            vmem_limit_bytes=48 * 1024 * 1024),
    )(trees, idx_t, *conv_params)

    # 64 -> 32 -> 1 head once over the whole batch in XLA (a per-step (TB,64)x(64,32)
    # matmul badly underfills the MXU and forces a lane-sparse output block).
    wl1, bl1, wl2, bl2 = head_params
    pooled = pooled.reshape(Bp, 64)[:B]
    z = jnp.dot(pooled, wl1, preferred_element_type=jnp.float32) + bl1
    z = jnp.where(z > 0.0, z, LEAKY_SLOPE * z)
    return jnp.dot(z, wl2, preferred_element_type=jnp.float32) + bl2


# ----------------------------------------------------------------------------
# Parameters (synthetic, deterministic; shapes follow BaoNet.__init__) + packing
# ----------------------------------------------------------------------------
def init_params(key, in_channels):
    def conv(k, cin, cout):
        ks = jax.random.split(k, 4)
        s = 1.0 / np.sqrt(3 * cin)
        return [jax.random.normal(ks[0], (cin, cout), jnp.float32) * s,   # tap: self
                jax.random.normal(ks[1], (cin, cout), jnp.float32) * s,   # tap: left
                jax.random.normal(ks[2], (cin, cout), jnp.float32) * s,   # tap: right
                jax.random.normal(ks[3], (1, cout), jnp.float32) * s]     # bias

    def linear(k, cin, cout):
        ks = jax.random.split(k, 2)
        s = 1.0 / np.sqrt(cin)
        return [jax.random.normal(ks[0], (cin, cout), jnp.float32) * s,
                jax.random.normal(ks[1], (1, cout), jnp.float32) * s]

    k1, k2, k3, k4, k5 = jax.random.split(key, 5)
    return (conv(k1, in_channels, 256)
            + conv(k2, 256, 128)
            + conv(k3, 128, 64)
            + linear(k4, 64, 32)
            + linear(k5, 32, 1))


def pack_params(raw, w_dtype=jnp.bfloat16):
    (w1s, w1l, w1r, b1,
     w2s, w2l, w2r, b2,
     w3s, w3l, w3r, b3,
     wl1, bl1, wl2, bl2) = raw
    conv_params = [
        jnp.concatenate([w1s, w1l, w1r], axis=1).astype(w_dtype),   # (Cin, 3*256) project-then-gather
        b1.astype(jnp.float32),
        jnp.concatenate([w2s, w2l, w2r], axis=1).astype(w_dtype),   # (256, 3*128) project-then-gather
        b2.astype(jnp.float32),
        jnp.concatenate([w3s, w3l, w3r], axis=0).astype(w_dtype),   # (3*128, 64)  gather-then-project
        b3.astype(jnp.float32),
    ]
    head_params = [wl1.astype(jnp.float32), bl1.astype(jnp.float32),
                   wl2.astype(jnp.float32), bl2.astype(jnp.float32)]
    return conv_params, head_params


if __name__ == "__main__":
    in_channels = 4
    key = jax.random.PRNGKey(0)
    kfeat, kparam = jax.random.split(key)
    feats = np.asarray(jax.random.normal(kfeat, (10, in_channels), jnp.float32))

    def leaf(i):
        return (feats[i],)

    def node(i, l, r):
        return (feats[i], l, r)

    # two trees of different sizes (exercises node padding): 7 nodes and 3 nodes
    t1 = node(0, node(1, leaf(2), leaf(3)), node(4, leaf(5), leaf(6)))
    t2 = node(7, leaf(8), leaf(9))

    trees_np, idx_np = prepare_trees_np([t1, t2])   # (2, 8, 4), (2, 8, 3)
    conv_params, head_params = pack_params(init_params(kparam, in_channels))

    out = bao_net_forward(jnp.asarray(trees_np), jnp.asarray(idx_np),
                          conv_params, head_params)
    jax.block_until_ready(out)
    assert out.shape == (2, 1) and out.dtype == jnp.float32
    assert bool(jnp.all(jnp.isfinite(out)))
    print("KERNEL_OK")
</pallas_src>

<mosaic_0001>
module attributes {stable_mosaic.version = 11 : i64} {
  func.func @_bao_kernel(%arg0: i32, %arg1: memref<1x8x4xf32, #tpu.memory_space<vmem>>, %arg2: memref<1x3x8xi32, #tpu.memory_space<vmem>>, %arg3: memref<4x768xbf16, #tpu.memory_space<vmem>>, %arg4: memref<1x256xf32, #tpu.memory_space<vmem>>, %arg5: memref<256x384xbf16, #tpu.memory_space<vmem>>, %arg6: memref<1x128xf32, #tpu.memory_space<vmem>>, %arg7: memref<384x64xbf16, #tpu.memory_space<vmem>>, %arg8: memref<1x64xf32, #tpu.memory_space<vmem>>, %arg9: memref<1x1x64xf32, #tpu.memory_space<vmem>>) attributes {dimension_semantics = [#tpu.dimension_semantics<parallel>], iteration_bounds = array<i64: 2>, scalar_prefetch = 0 : i64, scratch_operands = 0 : i64, tpu.core_type = #tpu.core_type<tc>, window_params = [{transform_indices = @transform_0, window_bounds = array<i64: 1, 8, 4>}, {transform_indices = @transform_1, window_bounds = array<i64: 1, 3, 8>}, {pipeline_mode = #tpu.pipeline_mode<synchronous>, transform_indices = @transform_2, window_bounds = array<i64: 4, 768>}, {pipeline_mode = #tpu.pipeline_mode<synchronous>, transform_indices = @transform_3, window_bounds = array<i64: 1, 256>}, {pipeline_mode = #tpu.pipeline_mode<synchronous>, transform_indices = @transform_4, window_bounds = array<i64: 256, 384>}, {pipeline_mode = #tpu.pipeline_mode<synchronous>, transform_indices = @transform_5, window_bounds = array<i64: 1, 128>}, {pipeline_mode = #tpu.pipeline_mode<synchronous>, transform_indices = @transform_6, window_bounds = array<i64: 384, 64>}, {pipeline_mode = #tpu.pipeline_mode<synchronous>, transform_indices = @transform_7, window_bounds = array<i64: 1, 64>}, {transform_indices = @transform_8, window_bounds = array<i64: 1, 1, 64>}]} {
    %c0 = arith.constant 0 : index
    %c0_0 = arith.constant 0 : index
    %c0_1 = arith.constant 0 : index
    %0 = vector.load %arg1[%c0, %c0_0, %c0_1] : memref<1x8x4xf32, #tpu.memory_space<vmem>>, vector<1x8x4xf32>
    %1 = vector.shape_cast %0 : vector<1x8x4xf32> to vector<8x4xf32>
    %c0_2 = arith.constant 0 : index
    %c0_3 = arith.constant 0 : index
    %c0_4 = arith.constant 0 : index
    %2 = vector.load %arg2[%c0_2, %c0_3, %c0_4] : memref<1x3x8xi32, #tpu.memory_space<vmem>>, vector<1x3x8xi32>
    %3 = tpu.iota {dimensions = array<i32: 0>} : vector<1x8xi32>
    %c8_i32 = arith.constant 8 : i32
    %4 = vector.broadcast %c8_i32 : i32 to vector<1x8xi32>
    %5 = arith.muli %3, %4 : vector<1x8xi32>
    %6 = tpu.iota {dimensions = array<i32: 1>} : vector<1x8xi32>
    %7 = vector.extract_strided_slice %2 {offsets = [0, 0, 0], sizes = [1, 1, 8], strides = [1, 1, 1]} : vector<1x3x8xi32> to vector<1x1x8xi32>
    %8 = vector.shape_cast %7 : vector<1x1x8xi32> to vector<1x8xi32>
    %c0_i32 = arith.constant 0 : i32
    %9 = vector.broadcast %c0_i32 : i32 to vector<1x8xi32>
    %10 = arith.cmpi sge, %8, %9 : vector<1x8xi32>
    %11 = vector.extract_strided_slice %2 {offsets = [0, 0, 0], sizes = [1, 1, 8], strides = [1, 1, 1]} : vector<1x3x8xi32> to vector<1x1x8xi32>
    %12 = vector.shape_cast %11 : vector<1x1x8xi32> to vector<1x8xi32>
    %13 = arith.addi %12, %5 : vector<1x8xi32>
    %c-1_i32 = arith.constant -1 : i32
    %14 = vector.broadcast %c-1_i32 : i32 to vector<1x8xi32>
    %15 = arith.select %10, %13, %14 : vector<1x8xi1>, vector<1x8xi32>
    %16 = vector.shape_cast %15 : vector<1x8xi32> to vector<8x1xi32>
    %17 = vector.broadcast %16 : vector<8x1xi32> to vector<8x8xi32>
    %18 = vector.broadcast %6 : vector<1x8xi32> to vector<8x8xi32>
    %19 = arith.cmpi eq, %17, %18 : vector<8x8xi32>
    %20 = arith.extui %19 : vector<8x8xi1> to vector<8x8xi32>
    %21 = arith.sitofp %20 : vector<8x8xi32> to vector<8x8xf32>
    %22 = arith.truncf %21 : vector<8x8xf32> to vector<8x8xbf16>
    %23 = vector.extract_strided_slice %2 {offsets = [0, 1, 0], sizes = [1, 1, 8], strides = [1, 1, 1]} : vector<1x3x8xi32> to vector<1x1x8xi32>
    %24 = vector.shape_cast %23 : vector<1x1x8xi32> to vector<1x8xi32>
    %c0_i32_5 = arith.constant 0 : i32
    %25 = vector.broadcast %c0_i32_5 : i32 to vector<1x8xi32>
    %26 = arith.cmpi sge, %24, %25 : vector<1x8xi32>
    %27 = vector.extract_strided_slice %2 {offsets = [0, 1, 0], sizes = [1, 1, 8], strides = [1, 1, 1]} : vector<1x3x8xi32> to vector<1x1x8xi32>
    %28 = vector.shape_cast %27 : vector<1x1x8xi32> to vector<1x8xi32>
    %29 = arith.addi %28, %5 : vector<1x8xi32>
    %c-1_i32_6 = arith.constant -1 : i32
    %30 = vector.broadcast %c-1_i32_6 : i32 to vector<1x8xi32>
    %31 = arith.select %26, %29, %30 : vector<1x8xi1>, vector<1x8xi32>
    %32 = vector.shape_cast %31 : vector<1x8xi32> to vector<8x1xi32>
    %33 = vector.broadcast %32 : vector<8x1xi32> to vector<8x8xi32>
    %34 = vector.broadcast %6 : vector<1x8xi32> to vector<8x8xi32>
    %35 = arith.cmpi eq, %33, %34 : vector<8x8xi32>
    %36 = arith.extui %35 : vector<8x8xi1> to vector<8x8xi32>
    %37 = arith.sitofp %36 : vector<8x8xi32> to vector<8x8xf32>
    %38 = arith.truncf %37 : vector<8x8xf32> to vector<8x8xbf16>
    %39 = vector.extract_strided_slice %2 {offsets = [0, 2, 0], sizes = [1, 1, 8], strides = [1, 1, 1]} : vector<1x3x8xi32> to vector<1x1x8xi32>
    %40 = vector.shape_cast %39 : vector<1x1x8xi32> to vector<1x8xi32>
    %c0_i32_7 = arith.constant 0 : i32
    %41 = vector.broadcast %c0_i32_7 : i32 to vector<1x8xi32>
    %42 = arith.cmpi sge, %40, %41 : vector<1x8xi32>
    %43 = vector.extract_strided_slice %2 {offsets = [0, 2, 0], sizes = [1, 1, 8], strides = [1, 1, 1]} : vector<1x3x8xi32> to vector<1x1x8xi32>
    %44 = vector.shape_cast %43 : vector<1x1x8xi32> to vector<1x8xi32>
    %45 = arith.addi %44, %5 : vector<1x8xi32>
    %c-1_i32_8 = arith.constant -1 : i32
    %46 = vector.broadcast %c-1_i32_8 : i32 to vector<1x8xi32>
    %47 = arith.select %42, %45, %46 : vector<1x8xi1>, vector<1x8xi32>
    %48 = vector.shape_cast %47 : vector<1x8xi32> to vector<8x1xi32>
    %49 = vector.broadcast %48 : vector<8x1xi32> to vector<8x8xi32>
    %50 = vector.broadcast %6 : vector<1x8xi32> to vector<8x8xi32>
    %51 = arith.cmpi eq, %49, %50 : vector<8x8xi32>
    %52 = arith.extui %51 : vector<8x8xi1> to vector<8x8xi32>
    %53 = arith.sitofp %52 : vector<8x8xi32> to vector<8x8xf32>
    %54 = arith.truncf %53 : vector<8x8xf32> to vector<8x8xbf16>
    %55 = vector.extract_strided_slice %2 {offsets = [0, 0, 0], sizes = [1, 1, 8], strides = [1, 1, 1]} : vector<1x3x8xi32> to vector<1x1x8xi32>
    %56 = vector.shape_cast %55 : vector<1x1x8xi32> to vector<1x8xi32>
    %c0_i32_9 = arith.constant 0 : i32
    %57 = vector.broadcast %c0_i32_9 : i32 to vector<1x8xi32>
    %58 = arith.cmpi sge, %56, %57 : vector<1x8xi32>
    %59 = arith.extui %58 : vector<1x8xi1> to vector<1x8xi32>
    %60 = arith.sitofp %59 : vector<1x8xi32> to vector<1x8xf32>
    %61 = vector.shape_cast %60 : vector<1x8xf32> to vector<8x1xf32>
    %62 = arith.truncf %1 : vector<8x4xf32> to vector<8x4xbf16>
    %c0_10 = arith.constant 0 : index
    %c0_11 = arith.constant 0 : index
    %63 = vector.load %arg3[%c0_10, %c0_11] : memref<4x768xbf16, #tpu.memory_space<vmem>>, vector<4x768xbf16>
    %cst = arith.constant dense<0.000000e+00> : vector<8x768xf32>
    %64 = tpu.matmul %62, %63, %cst {dimension_numbers = #tpu.dot_dimension_numbers<[1], [0], [0], [1], [0, 0, 1, 1], [], []>} : vector<8x4xbf16>, vector<4x768xbf16>, vector<8x768xf32> -> vector<8x768xf32>
    %65 = arith.truncf %64 : vector<8x768xf32> to vector<8x768xbf16>
    %66 = vector.extract_strided_slice %65 {offsets = [0, 0], sizes = [8, 256], strides = [1, 1]} : vector<8x768xbf16> to vector<8x256xbf16>
    %cst_12 = arith.constant dense<0.000000e+00> : vector<8x256xf32>
    %67 = tpu.matmul %22, %66, %cst_12 {dimension_numbers = #tpu.dot_dimension_numbers<[1], [0], [0], [1], [0, 0, 1, 1], [], []>} : vector<8x8xbf16>, vector<8x256xbf16>, vector<8x256xf32> -> vector<8x256xf32>
    %68 = vector.extract_strided_slice %65 {offsets = [0, 256], sizes = [8, 256], strides = [1, 1]} : vector<8x768xbf16> to vector<8x256xbf16>
    %cst_13 = arith.constant dense<0.000000e+00> : vector<8x256xf32>
    %69 = tpu.matmul %38, %68, %cst_13 {dimension_numbers = #tpu.dot_dimension_numbers<[1], [0], [0], [1], [0, 0, 1, 1], [], []>} : vector<8x8xbf16>, vector<8x256xbf16>, vector<8x256xf32> -> vector<8x256xf32>
    %70 = arith.addf %67, %69 : vector<8x256xf32>
    %71 = vector.extract_strided_slice %65 {offsets = [0, 512], sizes = [8, 256], strides = [1, 1]} : vector<8x768xbf16> to vector<8x256xbf16>
    %cst_14 = arith.constant dense<0.000000e+00> : vector<8x256xf32>
    %72 = tpu.matmul %54, %71, %cst_14 {dimension_numbers = #tpu.dot_dimension_numbers<[1], [0], [0], [1], [0, 0, 1, 1], [], []>} : vector<8x8xbf16>, vector<8x256xbf16>, vector<8x256xf32> -> vector<8x256xf32>
    %73 = arith.addf %70, %72 : vector<8x256xf32>
    %c0_15 = arith.constant 0 : index
    %c0_16 = arith.constant 0 : index
    %74 = vector.load %arg4[%c0_15, %c0_16] : memref<1x256xf32, #tpu.memory_space<vmem>>, vector<1x256xf32>
    %75 = vector.broadcast %74 : vector<1x256xf32> to vector<8x256xf32>
    %76 = arith.addf %73, %75 : vector<8x256xf32>
    %77 = vector.broadcast %61 : vector<8x1xf32> to vector<8x256xf32>
    %78 = arith.mulf %76, %77 : vector<8x256xf32>
    %79 = vector.shape_cast %78 : vector<8x256xf32> to vector<1x8x256xf32>
    %cst_17 = arith.constant dense<0.000000e+00> : vector<1xf32>
    %80 = vector.multi_reduction <add>, %79, %cst_17 [1, 2] : vector<1x8x256xf32> to vector<1xf32>
    %81 = vector.shape_cast %80 : vector<1xf32> to vector<1x1x1xf32>
    %82 = arith.mulf %79, %79 : vector<1x8x256xf32>
    %cst_18 = arith.constant dense<0.000000e+00> : vector<1xf32>
    %83 = vector.multi_reduction <add>, %82, %cst_18 [1, 2] : vector<1x8x256xf32> to vector<1xf32>
    %84 = vector.shape_cast %83 : vector<1xf32> to vector<1x1x1xf32>
    %cst_19 = arith.constant 4.8828125E-4 : f32
    %85 = vector.broadcast %cst_19 : f32 to vector<1x1x1xf32>
    %86 = arith.mulf %81, %85 : vector<1x1x1xf32>
    %cst_20 = arith.constant 2.048000e+03 : f32
    %87 = vector.broadcast %cst_20 : f32 to vector<1x1x1xf32>
    %88 = arith.mulf %87, %86 : vector<1x1x1xf32>
    %89 = arith.mulf %88, %86 : vector<1x1x1xf32>
    %90 = arith.subf %84, %89 : vector<1x1x1xf32>
    %cst_21 = arith.constant 4.88519785E-4 : f32
    %91 = vector.broadcast %cst_21 : f32 to vector<1x1x1xf32>
    %92 = arith.mulf %90, %91 : vector<1x1x1xf32>
    %cst_22 = arith.constant 0.000000e+00 : f32
    %93 = vector.broadcast %cst_22 : f32 to vector<1x1x1xf32>
    %94 = arith.maximumf %92, %93 : vector<1x1x1xf32>
    %95 = math.sqrt %94 : vector<1x1x1xf32>
    %cst_23 = arith.constant 9.99999974E-6 : f32
    %96 = vector.broadcast %cst_23 : f32 to vector<1x1x1xf32>
    %97 = arith.addf %95, %96 : vector<1x1x1xf32>
    %98 = tpu.reciprocal %97 {approx = true} : vector<1x1x1xf32> -> vector<1x1x1xf32>
    %99 = vector.broadcast %86 : vector<1x1x1xf32> to vector<1x8x256xf32>
    %100 = arith.subf %79, %99 : vector<1x8x256xf32>
    %101 = vector.broadcast %98 : vector<1x1x1xf32> to vector<1x8x256xf32>
    %102 = arith.mulf %100, %101 : vector<1x8x256xf32>
    %103 = vector.shape_cast %102 : vector<1x8x256xf32> to vector<8x256xf32>
    %cst_24 = arith.constant 0.000000e+00 : f32
    %104 = vector.broadcast %cst_24 : f32 to vector<8x256xf32>
    %105 = arith.cmpf ogt, %103, %104 : vector<8x256xf32>
    %cst_25 = arith.constant 0.00999999977 : f32
    %106 = vector.broadcast %cst_25 : f32 to vector<8x256xf32>
    %107 = arith.mulf %106, %103 : vector<8x256xf32>
    %108 = arith.select %105, %103, %107 : vector<8x256xi1>, vector<8x256xf32>
    %109 = arith.truncf %108 : vector<8x256xf32> to vector<8x256xbf16>
    %c0_26 = arith.constant 0 : index
    %c0_27 = arith.constant 0 : index
    %110 = vector.load %arg5[%c0_26, %c0_27] : memref<256x384xbf16, #tpu.memory_space<vmem>>, vector<256x384xbf16>
    %cst_28 = arith.constant dense<0.000000e+00> : vector<8x384xf32>
    %111 = tpu.matmul %109, %110, %cst_28 {dimension_numbers = #tpu.dot_dimension_numbers<[1], [0], [0], [1], [0, 0, 1, 1], [], []>} : vector<8x256xbf16>, vector<256x384xbf16>, vector<8x384xf32> -> vector<8x384xf32>
    %112 = arith.truncf %111 : vector<8x384xf32> to vector<8x384xbf16>
    %113 = vector.extract_strided_slice %112 {offsets = [0, 0], sizes = [8, 128], strides = [1, 1]} : vector<8x384xbf16> to vector<8x128xbf16>
    %cst_29 = arith.constant dense<0.000000e+00> : vector<8x128xf32>
    %114 = tpu.matmul %22, %113, %cst_29 {dimension_numbers = #tpu.dot_dimension_numbers<[1], [0], [0], [1], [0, 0, 1, 1], [], []>} : vector<8x8xbf16>, vector<8x128xbf16>, vector<8x128xf32> -> vector<8x128xf32>
    %115 = vector.extract_strided_slice %112 {offsets = [0, 128], sizes = [8, 128], strides = [1, 1]} : vector<8x384xbf16> to vector<8x128xbf16>
    %cst_30 = arith.constant dense<0.000000e+00> : vector<8x128xf32>
    %116 = tpu.matmul %38, %115, %cst_30 {dimension_numbers = #tpu.dot_dimension_numbers<[1], [0], [0], [1], [0, 0, 1, 1], [], []>} : vector<8x8xbf16>, vector<8x128xbf16>, vector<8x128xf32> -> vector<8x128xf32>
    %117 = arith.addf %114, %116 : vector<8x128xf32>
    %118 = vector.extract_strided_slice %112 {offsets = [0, 256], sizes = [8, 128], strides = [1, 1]} : vector<8x384xbf16> to vector<8x128xbf16>
    %cst_31 = arith.constant dense<0.000000e+00> : vector<8x128xf32>
    %119 = tpu.matmul %54, %118, %cst_31 {dimension_numbers = #tpu.dot_dimension_numbers<[1], [0], [0], [1], [0, 0, 1, 1], [], []>} : vector<8x8xbf16>, vector<8x128xbf16>, vector<8x128xf32> -> vector<8x128xf32>
    %120 = arith.addf %117, %119 : vector<8x128xf32>
    %c0_32 = arith.constant 0 : index
    %c0_33 = arith.constant 0 : index
    %121 = vector.load %arg6[%c0_32, %c0_33] : memref<1x128xf32, #tpu.memory_space<vmem>>, vector<1x128xf32>
    %122 = vector.broadcast %121 : vector<1x128xf32> to vector<8x128xf32>
    %123 = arith.addf %120, %122 : vector<8x128xf32>
    %124 = vector.broadcast %61 : vector<8x1xf32> to vector<8x128xf32>
    %125 = arith.mulf %123, %124 : vector<8x128xf32>
    %126 = vector.shape_cast %125 : vector<8x128xf32> to vector<1x8x128xf32>
    %cst_34 = arith.constant dense<0.000000e+00> : vector<1xf32>
    %127 = vector.multi_reduction <add>, %126, %cst_34 [1, 2] : vector<1x8x128xf32> to vector<1xf32>
    %128 = vector.shape_cast %127 : vector<1xf32> to vector<1x1x1xf32>
    %129 = arith.mulf %126, %126 : vector<1x8x128xf32>
    %cst_35 = arith.constant dense<0.000000e+00> : vector<1xf32>
    %130 = vector.multi_reduction <add>, %129, %cst_35 [1, 2] : vector<1x8x128xf32> to vector<1xf32>
    %131 = vector.shape_cast %130 : vector<1xf32> to vector<1x1x1xf32>
    %cst_36 = arith.constant 9.765625E-4 : f32
    %132 = vector.broadcast %cst_36 : f32 to vector<1x1x1xf32>
    %133 = arith.mulf %128, %132 : vector<1x1x1xf32>
    %cst_37 = arith.constant 1.024000e+03 : f32
    %134 = vector.broadcast %cst_37 : f32 to vector<1x1x1xf32>
    %135 = arith.mulf %134, %133 : vector<1x1x1xf32>
    %136 = arith.mulf %135, %133 : vector<1x1x1xf32>
    %137 = arith.subf %131, %136 : vector<1x1x1xf32>
    %cst_38 = arith.constant 9.77517105E-4 : f32
    %138 = vector.broadcast %cst_38 : f32 to vector<1x1x1xf32>
    %139 = arith.mulf %137, %138 : vector<1x1x1xf32>
    %cst_39 = arith.constant 0.000000e+00 : f32
    %140 = vector.broadcast %cst_39 : f32 to vector<1x1x1xf32>
    %141 = arith.maximumf %139, %140 : vector<1x1x1xf32>
    %142 = math.sqrt %141 : vector<1x1x1xf32>
    %cst_40 = arith.constant 9.99999974E-6 : f32
    %143 = vector.broadcast %cst_40 : f32 to vector<1x1x1xf32>
    %144 = arith.addf %142, %143 : vector<1x1x1xf32>
    %145 = tpu.reciprocal %144 {approx = true} : vector<1x1x1xf32> -> vector<1x1x1xf32>
    %146 = vector.broadcast %133 : vector<1x1x1xf32> to vector<1x8x128xf32>
    %147 = arith.subf %126, %146 : vector<1x8x128xf32>
    %148 = vector.broadcast %145 : vector<1x1x1xf32> to vector<1x8x128xf32>
    %149 = arith.mulf %147, %148 : vector<1x8x128xf32>
    %150 = vector.shape_cast %149 : vector<1x8x128xf32> to vector<8x128xf32>
    %cst_41 = arith.constant 0.000000e+00 : f32
    %151 = vector.broadcast %cst_41 : f32 to vector<8x128xf32>
    %152 = arith.cmpf ogt, %150, %151 : vector<8x128xf32>
    %cst_42 = arith.constant 0.00999999977 : f32
    %153 = vector.broadcast %cst_42 : f32 to vector<8x128xf32>
    %154 = arith.mulf %153, %150 : vector<8x128xf32>
    %155 = arith.select %152, %150, %154 : vector<8x128xi1>, vector<8x128xf32>
    %156 = arith.truncf %155 : vector<8x128xf32> to vector<8x128xbf16>
    %cst_43 = arith.constant dense<0.000000e+00> : vector<8x128xf32>
    %157 = tpu.matmul %22, %156, %cst_43 {dimension_numbers = #tpu.dot_dimension_numbers<[1], [0], [0], [1], [0, 0, 1, 1], [], []>} : vector<8x8xbf16>, vector<8x128xbf16>, vector<8x128xf32> -> vector<8x128xf32>
    %158 = arith.truncf %157 : vector<8x128xf32> to vector<8x128xbf16>
    %cst_44 = arith.constant dense<0.000000e+00> : vector<8x128xf32>
    %159 = tpu.matmul %38, %156, %cst_44 {dimension_numbers = #tpu.dot_dimension_numbers<[1], [0], [0], [1], [0, 0, 1, 1], [], []>} : vector<8x8xbf16>, vector<8x128xbf16>, vector<8x128xf32> -> vector<8x128xf32>
    %160 = arith.truncf %159 : vector<8x128xf32> to vector<8x128xbf16>
    %cst_45 = arith.constant dense<0.000000e+00> : vector<8x128xf32>
    %161 = tpu.matmul %54, %156, %cst_45 {dimension_numbers = #tpu.dot_dimension_numbers<[1], [0], [0], [1], [0, 0, 1, 1], [], []>} : vector<8x8xbf16>, vector<8x128xbf16>, vector<8x128xf32> -> vector<8x128xf32>
    %162 = arith.truncf %161 : vector<8x128xf32> to vector<8x128xbf16>
    %163 = tpu.concatenate %158, %160, %162 in 1 : vector<8x128xbf16>, vector<8x128xbf16>, vector<8x128xbf16> -> vector<8x384xbf16>
    %c0_46 = arith.constant 0 : index
    %c0_47 = arith.constant 0 : index
    %164 = vector.load %arg7[%c0_46, %c0_47] : memref<384x64xbf16, #tpu.memory_space<vmem>>, vector<384x64xbf16>
    %cst_48 = arith.constant dense<0.000000e+00> : vector<8x64xf32>
    %165 = tpu.matmul %163, %164, %cst_48 {dimension_numbers = #tpu.dot_dimension_numbers<[1], [0], [0], [1], [0, 0, 1, 1], [], []>} : vector<8x384xbf16>, vector<384x64xbf16>, vector<8x64xf32> -> vector<8x64xf32>
    %c0_49 = arith.constant 0 : index
    %c0_50 = arith.constant 0 : index
    %166 = vector.load %arg8[%c0_49, %c0_50] : memref<1x64xf32, #tpu.memory_space<vmem>>, vector<1x64xf32>
    %167 = vector.broadcast %166 : vector<1x64xf32> to vector<8x64xf32>
    %168 = arith.addf %165, %167 : vector<8x64xf32>
    %169 = vector.broadcast %61 : vector<8x1xf32> to vector<8x64xf32>
    %170 = arith.mulf %168, %169 : vector<8x64xf32>
    %171 = vector.shape_cast %170 : vector<8x64xf32> to vector<1x8x64xf32>
    %cst_51 = arith.constant dense<0.000000e+00> : vector<1xf32>
    %172 = vector.multi_reduction <add>, %171, %cst_51 [1, 2] : vector<1x8x64xf32> to vector<1xf32>
    %173 = vector.shape_cast %172 : vector<1xf32> to vector<1x1x1xf32>
    %174 = arith.mulf %171, %171 : vector<1x8x64xf32>
    %cst_52 = arith.constant dense<0.000000e+00> : vector<1xf32>
    %175 = vector.multi_reduction <add>, %174, %cst_52 [1, 2] : vector<1x8x64xf32> to vector<1xf32>
    %176 = vector.shape_cast %175 : vector<1xf32> to vector<1x1x1xf32>
    %cst_53 = arith.constant 0.001953125 : f32
    %177 = vector.broadcast %cst_53 : f32 to vector<1x1x1xf32>
    %178 = arith.mulf %173, %177 : vector<1x1x1xf32>
    %cst_54 = arith.constant 5.120000e+02 : f32
    %179 = vector.broadcast %cst_54 : f32 to vector<1x1x1xf32>
    %180 = arith.mulf %179, %178 : vector<1x1x1xf32>
    %181 = arith.mulf %180, %178 : vector<1x1x1xf32>
    %182 = arith.subf %176, %181 : vector<1x1x1xf32>
    %cst_55 = arith.constant 0.00195694715 : f32
    %183 = vector.broadcast %cst_55 : f32 to vector<1x1x1xf32>
    %184 = arith.mulf %182, %183 : vector<1x1x1xf32>
    %cst_56 = arith.constant 0.000000e+00 : f32
    %185 = vector.broadcast %cst_56 : f32 to vector<1x1x1xf32>
    %186 = arith.maximumf %184, %185 : vector<1x1x1xf32>
    %187 = math.sqrt %186 : vector<1x1x1xf32>
    %cst_57 = arith.constant 9.99999974E-6 : f32
    %188 = vector.broadcast %cst_57 : f32 to vector<1x1x1xf32>
    %189 = arith.addf %187, %188 : vector<1x1x1xf32>
    %190 = tpu.reciprocal %189 {approx = true} : vector<1x1x1xf32> -> vector<1x1x1xf32>
    %191 = vector.broadcast %178 : vector<1x1x1xf32> to vector<1x8x64xf32>
    %192 = arith.subf %171, %191 : vector<1x8x64xf32>
    %193 = vector.broadcast %190 : vector<1x1x1xf32> to vector<1x8x64xf32>
    %194 = arith.mulf %192, %193 : vector<1x8x64xf32>
    %195 = vector.shape_cast %194 : vector<1x8x64xf32> to vector<8x64xf32>
    %196 = vector.shape_cast %195 : vector<8x64xf32> to vector<1x8x64xf32>
    %197 = tpu.iota {dimensions = array<i32: 1>} : vector<1x8x1xi32>
    %c8_i32_58 = arith.constant 8 : i32
    %198 = vector.broadcast %c8_i32_58 : i32 to vector<1x8x1xi32>
    %199 = arith.cmpi slt, %197, %198 : vector<1x8x1xi32>
    %cst_59 = arith.constant 0xFF800000 : f32
    %200 = vector.shape_cast %199 : vector<1x8x1xi1> to vector<1x8x1xi1>
    %201 = vector.broadcast %200 : vector<1x8x1xi1> to vector<1x8x64xi1>
    %202 = vector.broadcast %cst_59 : f32 to vector<1x8x64xf32>
    %203 = arith.select %201, %196, %202 : vector<1x8x64xi1>, vector<1x8x64xf32>
    %cst_60 = arith.constant dense<0xFF800000> : vector<1x64xf32>
    %204 = vector.multi_reduction <maximumf>, %203, %cst_60 [1] : vector<1x8x64xf32> to vector<1x64xf32>
    %205 = vector.shape_cast %204 : vector<1x64xf32> to vector<1x1x64xf32>
    %c0_61 = arith.constant 0 : index
    %c0_62 = arith.constant 0 : index
    %c0_63 = arith.constant 0 : index
    %206 = vector.load %arg9[%c0_61, %c0_62, %c0_63] : memref<1x1x64xf32, #tpu.memory_space<vmem>>, vector<1x1x64xf32>
    tpu.vector_store %arg9[%c0_61, %c0_62, %c0_63], %205 {strides = array<i32>} : memref<1x1x64xf32, #tpu.memory_space<vmem>>, vector<1x1x64xf32>,
    return
  }
  func.func @transform_0(%arg0: i32) -> (i32, i32, i32) {
    %c0_i32 = arith.constant 0 : i32
    %c0_i32_0 = arith.constant 0 : i32
    %c0_i32_1 = arith.constant 0 : i32
    return %arg0, %c0_i32, %c0_i32_0 : i32, i32, i32
  }
  func.func @transform_1(%arg0: i32) -> (i32, i32, i32) {
    %c0_i32 = arith.constant 0 : i32
    %c0_i32_0 = arith.constant 0 : i32
    %c0_i32_1 = arith.constant 0 : i32
    return %arg0, %c0_i32, %c0_i32_0 : i32, i32, i32
  }
  func.func @transform_2(%arg0: i32) -> (i32, i32) {
    %c0_i32 = arith.constant 0 : i32
    %c0_i32_0 = arith.constant 0 : i32
    %c0_i32_1 = arith.constant 0 : i32
    return %c0_i32, %c0_i32_0 : i32, i32
  }
  func.func @transform_3(%arg0: i32) -> (i32, i32) {
    %c0_i32 = arith.constant 0 : i32
    %c0_i32_0 = arith.constant 0 : i32
    %c0_i32_1 = arith.constant 0 : i32
    return %c0_i32, %c0_i32_0 : i32, i32
  }
  func.func @transform_4(%arg0: i32) -> (i32, i32) {
    %c0_i32 = arith.constant 0 : i32
    %c0_i32_0 = arith.constant 0 : i32
    %c0_i32_1 = arith.constant 0 : i32
    return %c0_i32, %c0_i32_0 : i32, i32
  }
  func.func @transform_5(%arg0: i32) -> (i32, i32) {
    %c0_i32 = arith.constant 0 : i32
    %c0_i32_0 = arith.constant 0 : i32
    %c0_i32_1 = arith.constant 0 : i32
    return %c0_i32, %c0_i32_0 : i32, i32
  }
  func.func @transform_6(%arg0: i32) -> (i32, i32) {
    %c0_i32 = arith.constant 0 : i32
    %c0_i32_0 = arith.constant 0 : i32
    %c0_i32_1 = arith.constant 0 : i32
    return %c0_i32, %c0_i32_0 : i32, i32
  }
  func.func @transform_7(%arg0: i32) -> (i32, i32) {
    %c0_i32 = arith.constant 0 : i32
    %c0_i32_0 = arith.constant 0 : i32
    %c0_i32_1 = arith.constant 0 : i32
    return %c0_i32, %c0_i32_0 : i32, i32
  }
  func.func @transform_8(%arg0: i32) -> (i32, i32, i32) {
    %c0_i32 = arith.constant 0 : i32
    %c0_i32_0 = arith.constant 0 : i32
    %c0_i32_1 = arith.constant 0 : i32
    return %arg0, %c0_i32, %c0_i32_0 : i32, i32, i32
  }
}

</mosaic_0001>

<llo_original>
// kernel: tpu_custom_call.1
$region0: #{tpu_custom_call.1}
  #allocation0 [shape = 'u32[]', space=smem, size = 0x4, offset = 0x4, fixed_abs, tag = 'smem constant byte address 0x4 - core index']
  #allocation1 [shape = 'u32[144,128]{1,0:T(1,128)}', space=vmem, size = 0x12000, scoped, tag = 'internal scratch']
  %s0 = inlined_call_operand.vmem [shape: f32[2,8,4], index: 0, kind: input, shape index: {}]
  %s1 = inlined_call_operand.vmem [shape: s32[2,3,8], index: 1, kind: input, shape index: {}]
  %s2 = inlined_call_operand.vmem [shape: bf16[4,768], index: 2, kind: input, shape index: {}]
  %s3 = inlined_call_operand.vmem [shape: f32[1,256], index: 3, kind: input, shape index: {}]
  %s4 = inlined_call_operand.hbm [shape: bf16[256,384], index: 4, kind: input, shape index: {}]
  %s5 = inlined_call_operand.vmem [shape: f32[1,128], index: 5, kind: input, shape index: {}]
  %s6 = inlined_call_operand.vmem [shape: bf16[384,64], index: 6, kind: input, shape index: {}]
  %s7 = inlined_call_operand.vmem [shape: f32[1,64], index: 7, kind: input, shape index: {}]
  %s8 = inlined_call_operand.hbm [shape: f32[2,1,64], index: 8, kind: output, shape index: {}]
  %s9 = sld [smem:[#allocation0]]
  $region69: #{tpu_custom_call.1} parent=0
    _
  %s11 = ssub.s32 1, %s9
  %s12 = scalar_select 0, %s11, %s9
  $region1: #{tpu_custom_call.1} parent=0
    #allocation2 [shape = 'u8[196608]{0}', space=vmem, size = 0x30000, scoped, tag = 'input window, operand 4, single buffered']
    #allocation3 [shape = 's32[2]{0}', space=sflag, size = 0x8, scoped, tag = 'scoped memory for tpu_custom_call.1']
    #allocation4 [shape = 's32[2]{0}', space=sflag, size = 0x8, scoped, tag = 'scoped memory for tpu_custom_call.1']
    #allocation5 [shape = 'u8[1024]{0}', space=vmem, size = 0x400, scoped, tag = 'output window, operand 0']
    %13 = vsyncpa [#allocation3], 0
    %14 = vsyncpa [#allocation4], 0
    %s15 = scalar_lea.sflag [#allocation4], 1
    %16 = vsyncpa %s15, 0
    loop: start=0, step=1, limit=4
    $region2: #{tpu_custom_call.1} parent=1 // loop_pre_header
      _
    $region3: #{tpu_custom_call.1} parent=1 // loop_header
      %s18 = sphi 0, %s22
      %p19 = scmp.ge.s32.totalorder %s18, 4
      %s28 = sphi 0, %s30
      %s31 = sphi 0, %s28
      %s32 = sphi 0, %s31
      %s48 = sphi 0, %s32
      %s54 = sphi 0, %s56
      %s57 = sphi 0, %s54
      %s58 = sphi 0, %s57
      %s74 = sphi 0, %s58
      %s78 = sphi 0, %s78
      %s80 = sphi 0, %s78
      %s81 = sphi 0, %s80
      %s95 = sphi 0, %s81
      %s99 = sphi 0, %s99
      %s101 = sphi 0, %s99
      %s102 = sphi 0, %s101
      %s116 = sphi 0, %s102
      %s120 = sphi 0, %s120
      %s122 = sphi 0, %s120
      %s123 = sphi 0, %s122
      %s137 = sphi 0, %s123
      %s141 = sphi 0, %s141
      %s143 = sphi 0, %s141
      %s144 = sphi 0, %s143
      %s158 = sphi 0, %s144
      %s162 = sphi 0, %s162
      %s164 = sphi 0, %s162
      %s165 = sphi 0, %s164
      %s179 = sphi 0, %s165
      %s183 = sphi 0, %s183
      %s185 = sphi 0, %s183
      %s186 = sphi 0, %s185
      %s200 = sphi 0, %s186
      %s206 = sphi 0, %s208
      %s209 = sphi 0, %s206
      %s210 = sphi 0, %s209
      %s226 = sphi 0, %s210
    $region4: #{tpu_custom_call.1} parent=1 // loop_header_branch
      %21 = sbr.rel (%p19) target = $region8
    $region5: #{tpu_custom_call.1} parent=1 // loop_body
      %s23 = ssub.s32 %s18, 1
      %s24 = ssub.s32 %s18, 2
      %s25 = sadd.s32 %s18, 1
      %s26 = ssub.s32 %s18, %s25
      %p27 = scmp.eq.s32.totalorder %s26, 0
      %s29 = sadd.s32 %s28, 1
      %s30 = scalar_select %p27, %s28, %s29
      %p33 = pneg %p27
      %p34 = scmp.eq.s32.totalorder %s18, 1
      %p35 = por %p33, %p34
      %p36 = scmp.ne.s32.totalorder %s28, %s31
      %p37 = scmp.eq.s32.totalorder %s18, 0
      %p38 = por %p36, %p37
      %p39 = scmp.ne.s32.totalorder %s28, %s31
      %p40 = scmp.eq.s32.totalorder %s23, 1
      %p41 = por %p39, %p40
      %p42 = scmp.ne.s32.totalorder %s31, %s32
      %p43 = scmp.eq.s32.totalorder %s23, 0
      %p44 = por %p42, %p43
      %p45 = scmp.ne.s32.totalorder %s31, %s32
      %p46 = scmp.eq.s32.totalorder %s24, 1
      %p47 = por %p45, %p46
      %p49 = scmp.ne.s32.totalorder %s32, %s48
      %p50 = scmp.eq.s32.totalorder %s24, 0
      %p51 = por %p49, %p50
      %s52 = ssub.s32 %s18, %s25
      %p53 = scmp.eq.s32.totalorder %s52, 0
      %s55 = sadd.s32 %s54, 1
      %s56 = scalar_select %p53, %s54, %s55
      %p59 = pneg %p53
      %p60 = scmp.eq.s32.totalorder %s18, 1
      %p61 = por %p59, %p60
      %p62 = scmp.ne.s32.totalorder %s54, %s57
      %p63 = scmp.eq.s32.totalorder %s18, 0
      %p64 = por %p62, %p63
      %p65 = scmp.ne.s32.totalorder %s54, %s57
      %p66 = scmp.eq.s32.totalorder %s23, 1
      %p67 = por %p65, %p66
      %p68 = scmp.ne.s32.totalorder %s57, %s58
      %p69 = scmp.eq.s32.totalorder %s23, 0
      %p70 = por %p68, %p69
      %p71 = scmp.ne.s32.totalorder %s57, %s58
      %p72 = scmp.eq.s32.totalorder %s24, 1
      %p73 = por %p71, %p72
      %p75 = scmp.ne.s32.totalorder %s58, %s74
      %p76 = scmp.eq.s32.totalorder %s24, 0
      %p77 = por %p75, %p76
      %s79 = sadd.s32 %s78, 1
      %p82 = scmp.eq.s32.totalorder %s18, 1
      %p83 = scmp.ne.s32.totalorder %s78, %s80
      %p84 = scmp.eq.s32.totalorder %s18, 0
      %p85 = por %p83, %p84
      %p86 = scmp.ne.s32.totalorder %s78, %s80
      %p87 = scmp.eq.s32.totalorder %s23, 1
      %p88 = por %p86, %p87
      %p89 = scmp.ne.s32.totalorder %s80, %s81
      %p90 = scmp.eq.s32.totalorder %s23, 0
      %p91 = por %p89, %p90
      %p92 = scmp.ne.s32.totalorder %s80, %s81
      %p93 = scmp.eq.s32.totalorder %s24, 1
      %p94 = por %p92, %p93
      %p96 = scmp.ne.s32.totalorder %s81, %s95
      %p97 = scmp.eq.s32.totalorder %s24, 0
      %p98 = por %p96, %p97
      %s100 = sadd.s32 %s99, 1
      %p103 = scmp.eq.s32.totalorder %s18, 1
      %p104 = scmp.ne.s32.totalorder %s99, %s101
      %p105 = scmp.eq.s32.totalorder %s18, 0
      %p106 = por %p104, %p105
      %p107 = scmp.ne.s32.totalorder %s99, %s101
      %p108 = scmp.eq.s32.totalorder %s23, 1
      %p109 = por %p107, %p108
      %p110 = scmp.ne.s32.totalorder %s101, %s102
      %p111 = scmp.eq.s32.totalorder %s23, 0
      %p112 = por %p110, %p111
      %p113 = scmp.ne.s32.totalorder %s101, %s102
      %p114 = scmp.eq.s32.totalorder %s24, 1
      %p115 = por %p113, %p114
      %p117 = scmp.ne.s32.totalorder %s102, %s116
      %p118 = scmp.eq.s32.totalorder %s24, 0
      %p119 = por %p117, %p118
      %s121 = sadd.s32 %s120, 1
      %p124 = scmp.eq.s32.totalorder %s18, 1
      %p125 = scmp.ne.s32.totalorder %s120, %s122
      %p126 = scmp.eq.s32.totalorder %s18, 0
      %p127 = por %p125, %p126
      %p128 = scmp.ne.s32.totalorder %s120, %s122
      %p129 = scmp.eq.s32.totalorder %s23, 1
      %p130 = por %p128, %p129
      %p131 = scmp.ne.s32.totalorder %s122, %s123
      %p132 = scmp.eq.s32.totalorder %s23, 0
      %p133 = por %p131, %p132
      %p134 = scmp.ne.s32.totalorder %s122, %s123
      %p135 = scmp.eq.s32.totalorder %s24, 1
      %p136 = por %p134, %p135
      %p138 = scmp.ne.s32.totalorder %s123, %s137
      %p139 = scmp.eq.s32.totalorder %s24, 0
      %p140 = por %p138, %p139
      %s142 = sadd.s32 %s141, 1
      %p145 = scmp.eq.s32.totalorder %s18, 1
      %p146 = scmp.ne.s32.totalorder %s141, %s143
      %p147 = scmp.eq.s32.totalorder %s18, 0
      %p148 = por %p146, %p147
      %p149 = scmp.ne.s32.totalorder %s141, %s143
      %p150 = scmp.eq.s32.totalorder %s23, 1
      %p151 = por %p149, %p150
      %p152 = scmp.ne.s32.totalorder %s143, %s144
      %p153 = scmp.eq.s32.totalorder %s23, 0
      %p154 = por %p152, %p153
      %p155 = scmp.ne.s32.totalorder %s143, %s144
      %p156 = scmp.eq.s32.totalorder %s24, 1
      %p157 = por %p155, %p156
      %p159 = scmp.ne.s32.totalorder %s144, %s158
      %p160 = scmp.eq.s32.totalorder %s24, 0
      %p161 = por %p159, %p160
      %s163 = sadd.s32 %s162, 1
      %p166 = scmp.eq.s32.totalorder %s18, 1
      %p167 = scmp.ne.s32.totalorder %s162, %s164
      %p168 = scmp.eq.s32.totalorder %s18, 0
      %p169 = por %p167, %p168
      %p170 = scmp.ne.s32.totalorder %s162, %s164
      %p171 = scmp.eq.s32.totalorder %s23, 1
      %p172 = por %p170, %p171
      %p173 = scmp.ne.s32.totalorder %s164, %s165
      %p174 = scmp.eq.s32.totalorder %s23, 0
      %p175 = por %p173, %p174
      %p176 = scmp.ne.s32.totalorder %s164, %s165
      %p177 = scmp.eq.s32.totalorder %s24, 1
      %p178 = por %p176, %p177
      %p180 = scmp.ne.s32.totalorder %s165, %s179
      %p181 = scmp.eq.s32.totalorder %s24, 0
      %p182 = por %p180, %p181
      %s184 = sadd.s32 %s183, 1
      %p187 = scmp.eq.s32.totalorder %s18, 1
      %p188 = scmp.ne.s32.totalorder %s183, %s185
      %p189 = scmp.eq.s32.totalorder %s18, 0
      %p190 = por %p188, %p189
      %p191 = scmp.ne.s32.totalorder %s183, %s185
      %p192 = scmp.eq.s32.totalorder %s23, 1
      %p193 = por %p191, %p192
      %p194 = scmp.ne.s32.totalorder %s185, %s186
      %p195 = scmp.eq.s32.totalorder %s23, 0
      %p196 = por %p194, %p195
      %p197 = scmp.ne.s32.totalorder %s185, %s186
      %p198 = scmp.eq.s32.totalorder %s24, 1
      %p199 = por %p197, %p198
      %p201 = scmp.ne.s32.totalorder %s186, %s200
      %p202 = scmp.eq.s32.totalorder %s24, 0
      %p203 = por %p201, %p202
      %s204 = ssub.s32 %s18, %s25
      %p205 = scmp.eq.s32.totalorder %s204, 0
      %s207 = sadd.s32 %s206, 1
      %s208 = scalar_select %p205, %s206, %s207
      %p211 = pneg %p205
      %p212 = scmp.eq.s32.totalorder %s18, 1
      %p213 = por %p211, %p212
      %p214 = scmp.ne.s32.totalorder %s206, %s209
      %p215 = scmp.eq.s32.totalorder %s18, 0
      %p216 = por %p214, %p215
      %p217 = scmp.ne.s32.totalorder %s206, %s209
      %p218 = scmp.eq.s32.totalorder %s23, 1
      %p219 = por %p217, %p218
      %p220 = scmp.ne.s32.totalorder %s209, %s210
      %p221 = scmp.eq.s32.totalorder %s23, 0
      %p222 = por %p220, %p221
      %p223 = scmp.ne.s32.totalorder %s209, %s210
      %p224 = scmp.eq.s32.totalorder %s24, 1
      %p225 = por %p223, %p224
      %p227 = scmp.ne.s32.totalorder %s210, %s226
      %p228 = scmp.eq.s32.totalorder %s24, 0
      %p229 = por %p227, %p228
      %p230 = scmp.le.s32.totalorder 1, %s18
      %p231 = scmp.lt.s32.totalorder %s18, 3
      %p232 = pnand %p230, %p231
      %p233 = pneg %p232
      // Predicated region
      $region9: #{tpu_custom_call.1} parent=5 // pred_check
        _
      $region10: #{tpu_custom_call.1} parent=5 // pred_check_branch
        %235 = sbr.rel (%p232) target = $region12
      $region11: #{tpu_custom_call.1} parent=5 // pred_region
        %s236 = ssub.s32 %s18, 1
        // Predicated region
        $region13: #{tpu_custom_call.1} parent=11 // pred_check
          %p237 = pneg %p91
        $region14: #{tpu_custom_call.1} parent=11 // pred_check_branch
          %239 = sbr.rel (%p237) target = $region16
        $region15: #{tpu_custom_call.1} parent=11 // pred_region
          _
        $region16: #{tpu_custom_call.1} parent=11 // pred_fallthru
          _
        // Predicated region
        $region17: #{tpu_custom_call.1} parent=11 // pred_check
          %p240 = pneg %p112
        $region18: #{tpu_custom_call.1} parent=11 // pred_check_branch
          %242 = sbr.rel (%p240) target = $region20
        $region19: #{tpu_custom_call.1} parent=11 // pred_region
          _
        $region20: #{tpu_custom_call.1} parent=11 // pred_fallthru
          _
        // Predicated region
        $region21: #{tpu_custom_call.1} parent=11 // pred_check
          %p243 = pneg %p133
        $region22: #{tpu_custom_call.1} parent=11 // pred_check_branch
          %245 = sbr.rel (%p243) target = $region24
        $region23: #{tpu_custom_call.1} parent=11 // pred_region
          %s247 = ssub.s32 6144, 6144
          %248 = vsyncadd [#allocation3], %s247
          %s249 = sshll.u32 [#allocation2], 4
          %s250 = int_to_ptr.vmem [resolvable:$true] %s249
          %255 = dma.hbm_to_vmem [thread:$0]  %s4, 6144, %s250, [#allocation3], 192, 192, 12
        $region24: #{tpu_custom_call.1} parent=11 // pred_fallthru
          _
        // Predicated region
        $region25: #{tpu_custom_call.1} parent=11 // pred_check
          %p256 = pneg %p154
        $region26: #{tpu_custom_call.1} parent=11 // pred_check_branch
          %258 = sbr.rel (%p256) target = $region28
        $region27: #{tpu_custom_call.1} parent=11 // pred_region
          _
        $region28: #{tpu_custom_call.1} parent=11 // pred_fallthru
          _
        // Predicated region
        $region29: #{tpu_custom_call.1} parent=11 // pred_check
          %p259 = pneg %p175
        $region30: #{tpu_custom_call.1} parent=11 // pred_check_branch
          %261 = sbr.rel (%p259) target = $region32
        $region31: #{tpu_custom_call.1} parent=11 // pred_region
          _
        $region32: #{tpu_custom_call.1} parent=11 // pred_fallthru
          _
        // Predicated region
        $region33: #{tpu_custom_call.1} parent=11 // pred_check
          %p262 = pneg %p196
        $region34: #{tpu_custom_call.1} parent=11 // pred_check_branch
          %264 = sbr.rel (%p262) target = $region36
        $region35: #{tpu_custom_call.1} parent=11 // pred_region
          _
        $region36: #{tpu_custom_call.1} parent=11 // pred_fallthru
          _
      $region12: #{tpu_custom_call.1} parent=5 // pred_fallthru
        _
      %p265 = scmp.lt.s32.totalorder %s18, 2
      // Predicated region
      $region37: #{tpu_custom_call.1} parent=5 // pred_check
        %p266 = pneg %p265
      $region38: #{tpu_custom_call.1} parent=5 // pred_check_branch
        %268 = sbr.rel (%p266) target = $region40
      $region39: #{tpu_custom_call.1} parent=5 // pred_region
        // Predicated region
        $region41: #{tpu_custom_call.1} parent=39 // pred_check
          %p269 = pneg %p38
        $region42: #{tpu_custom_call.1} parent=39 // pred_check_branch
          %271 = sbr.rel (%p269) target = $region44
        $region43: #{tpu_custom_call.1} parent=39 // pred_region
          %p272 = scmp.lt.s32.totalorder %s18, 1
          %s273 = scalar_select %p272, %s18, 1
          %s274 = smul.addr %s273, 8
          %s275 = scalar_lea.vmem %s0, %s274
        $region44: #{tpu_custom_call.1} parent=39 // pred_fallthru
          _
        // Predicated region
        $region45: #{tpu_custom_call.1} parent=39 // pred_check
          %p276 = pneg %p64
        $region46: #{tpu_custom_call.1} parent=39 // pred_check_branch
          %278 = sbr.rel (%p276) target = $region48
        $region47: #{tpu_custom_call.1} parent=39 // pred_region
          %p279 = scmp.lt.s32.totalorder %s18, 1
          %s280 = scalar_select %p279, %s18, 1
          %s281 = smul.addr %s280, 4
          %s282 = scalar_lea.vmem %s1, %s281
        $region48: #{tpu_custom_call.1} parent=39 // pred_fallthru
          _
      $region40: #{tpu_custom_call.1} parent=5 // pred_fallthru
        _
      %p283 = scmp.le.s32.totalorder 1, %s18
      %p284 = scmp.lt.s32.totalorder %s18, 3
      %p285 = pnand %p283, %p284
      %p286 = pneg %p285
      // Predicated region
      $region49: #{tpu_custom_call.1} parent=5 // pred_check
        _
      $region50: #{tpu_custom_call.1} parent=5 // pred_check_branch
        %288 = sbr.rel (%p285) target = $region52
      $region51: #{tpu_custom_call.1} parent=5 // pred_region
        %s289 = ssub.s32 %s18, 1
        // Predicated region
        $region53: #{tpu_custom_call.1} parent=51 // pred_check
          %p290 = pneg %p133
        $region54: #{tpu_custom_call.1} parent=51 // pred_check_branch
          %292 = sbr.rel (%p290) target = $region56
        $region55: #{tpu_custom_call.1} parent=51 // pred_region
          %293 = dma.done [#allocation3], 6144
        $region56: #{tpu_custom_call.1} parent=51 // pred_fallthru
          _
        %p294 = scmp.lt.s32.totalorder %s23, 1
        %s295 = scalar_select %p294, %s23, 1
        %s296 = smul.addr %s295, 8
        %s297 = scalar_lea.vmem %s0, %s296
        %p298 = pneg %p44
        %p299 = pneg %p41
        %p300 = scmp.lt.s32.totalorder %s23, 1
        %s301 = scalar_select %p300, %s23, 1
        %s302 = smul.addr %s301, 4
        %s303 = scalar_lea.vmem %s1, %s302
        %p304 = pneg %p70
        %p305 = pneg %p67
        %p306 = pneg %p91
        %p307 = pneg %p88
        %p308 = pneg %p112
        %p309 = pneg %p109
        %p310 = pneg %p133
        %p311 = pneg %p130
        %p312 = pneg %p154
        %p313 = pneg %p151
        %p314 = pneg %p175
        %p315 = pneg %p172
        %p316 = pneg %p196
        %p317 = pneg %p193
        %p318 = pneg %p222
        %p319 = pneg %p219
        %s320 = sand.u32 %s209, 1
        %s321 = scalar_lea.sflag [#allocation4], %s320
        %s322 = sand.u32 %s209, 1
        %s323 = scalar_lea.vmem [#allocation5], %s322
        %p324 = scmp.lt.s32.totalorder %s23, 1
        %s325 = scalar_select %p324, %s23, 1
        %s326 = smul.addr %s325, 8
        %s327 = scalar_lea.vmem %s0, %s326
        %p328 = scmp.lt.s32.totalorder %s23, 1
        %s329 = scalar_select %p328, %s23, 1
        %s330 = smul.addr %s329, 4
        %s331 = scalar_lea.vmem %s1, %s330
        %v333 = vld [vmem:[%s327] sm:$0xff]
        %v334 = vld [vmem:[%s331] sm:$0x7]
        %v335 = vlaneseq
        %v336 = vshrl.u32 %v335, 7
        %v337 = vmul.u32 %v336, 8
        %v338 = vlaneseq
        %v339 = vand.u32 %v338, 127
        %vm340 = vcmp.ge.s32.totalorder %v334, 0
        %v341 = vadd.s32 %v334, %v337
        %v342 = vsel %vm340, %v341, 4294967295
        %v343 = vlaneseq
        %v344 = vshrl.u32 %v343, 7
        %v345 = vsub.s32 0, %v344
        %v346 = vrot.slane %v342, %v345
        %348 = vbcast.lane.b32.xlu0 %v346, 256
        %v349 = vpop.permute.xlu0 %348
        %vm350 = vcmp.eq.s32.totalorder %v349, %v339
        %v351 = vsel %vm350, 1, 0
        %v352 = vcvt.s32.f32 %v351
        %v353 = vpack.c.bf16 %v352, %v352
        %v354 = vrot.slane %v337, 7
        %v355 = vadd.s32 %v334, %v354
        %v356 = vsel %vm340, %v355, 4294967295
        %v357 = vlaneseq
        %v358 = vshrl.u32 %v357, 7
        %v359 = vsub.s32 1, %v358
        %v360 = vrot.slane %v356, %v359
        %362 = vbcast.lane.b32.xlu0 %v360, 256
        %v363 = vpop.permute.xlu0 %362
        %vm364 = vcmp.eq.s32.totalorder %v363, %v339
        %v365 = vsel %vm364, 1, 0
        %v366 = vcvt.s32.f32 %v365
        %v367 = vpack.c.bf16 %v366, %v366
        %v368 = vrot.slane %v337, 6
        %v369 = vadd.s32 %v334, %v368
        %v370 = vsel %vm340, %v369, 4294967295
        %v371 = vlaneseq
        %v372 = vshrl.u32 %v371, 7
        %v373 = vsub.s32 2, %v372
        %v374 = vrot.slane %v370, %v373
        %376 = vbcast.lane.b32.xlu0 %v374, 256
        %v377 = vpop.permute.xlu0 %376
        %vm378 = vcmp.eq.s32.totalorder %v377, %v339
        %v379 = vsel %vm378, 1, 0
        %v380 = vcvt.s32.f32 %v379
        %v381 = vpack.c.bf16 %v380, %v380
        %v382 = vsel %vm340, 1, 0
        %v383 = vcvt.s32.f32 %v382
        %v384 = vlaneseq
        %v385 = vshrl.u32 %v384, 7
        %v386 = vsub.s32 0, %v385
        %v387 = vrot.slane %v383, %v386
        %389 = vbcast.lane.b32.xlu0 %v387, 256
        %v390 = vpop.permute.xlu0 %389
        %v391 = vpack.c.bf16 %v333, %v333
        %v392 = vld [vmem:[%s2] sm:$0xff]
        %v393 = vld [vmem:[%s2 + $0x8] sm:$0xf]
        %v396 = vcombine.high %v392, %v392
        %v398 = vunpack.c.l.s4 1983009808
        %v399 = vunpack.c.0.s8 %v398
        %v400 = vlaneseq
        %v401 = vshrl.u32 %v400, 7
        %v402 = vsub.s32 %v399, %v401
        %v403 = vrot.slane %v392, %v402
        %v405 = vunpack.c.l.s4 1983009808
        %v406 = vunpack.c.0.s8 %v405
        %v407 = vlaneseq
        %v408 = vshrl.u32 %v407, 7
        %v409 = vsub.s32 %v406, %v408
        %v410 = vrot.slane %v396, %v409
        %v411 = vcombine.high %v403, %v403
        %v412 = vcombine.high %v410, %v410
        %v414 = vunpack.c.l.s4 1983009808
        %v415 = vunpack.c.0.s8 %v414
        %v416 = vlaneseq
        %v417 = vshrl.u32 %v416, 7
        %v418 = vsub.s32 %v415, %v417
        %v419 = vrot.slane %v393, %v418
        %v420 = vcombine.high %v419, %v419
        %vm421 = vcmask 31744
        %v423 = vsel %vm421, %v391, 0
        %vm425 = vcmask 1041408
        %v427 = vsel %vm425, %v403, 0
        %v430 = vsel %vm425, %v411, 0
        %v433 = vsel %vm425, %v410, 0
        %v436 = vsel %vm425, %v412, 0
        %v439 = vsel %vm425, %v419, 0
        %v442 = vsel %vm425, %v420, 0
        %444 = vmatprep.subr.bf16.mxu0 %v430
        %445 = vmatpush1.bf16.msra.mxu0 %v427
        %446 = vmatprep.subr.bf16.mxu0 0
        %447 = vmatpush1.bf16.msra.mxu0 0
        %448 = vmatprep.subr.bf16.mxu0 0
        %449 = vmatpush1.bf16.msra.mxu0 0
        %450 = vmatprep.subr.bf16.mxu0 0
        %451 = vmatpush1.bf16.msra.mxu0 0
        %452 = vmatprep.subr.bf16.mxu0 0
        %453 = vmatpush1.bf16.msra.mxu0 0
        %454 = vmatprep.subr.bf16.mxu0 0
        %455 = vmatpush1.bf16.msra.mxu0 0
        %456 = vmatprep.subr.bf16.mxu0 0
        %457 = vmatpush1.bf16.msra.mxu0 0
        %458 = vmatprep.subr.bf16.mxu0 0
        %459 = vmatpush1.bf16.msra.mxu0 0
        %460 = vmatprep.subr.bf16.mxu0 0
        %461 = vmatpush1.bf16.msra.mxu0 0
        %462 = vmatprep.subr.bf16.mxu0 0
        %463 = vmatpush1.bf16.msra.mxu0 0
        %464 = vmatprep.subr.bf16.mxu0 0
        %465 = vmatpush1.bf16.msra.mxu0 0
        %466 = vmatprep.subr.bf16.mxu0 0
        %467 = vmatpush1.bf16.msra.mxu0 0
        %468 = vmatprep.subr.bf16.mxu0 0
        %469 = vmatpush1.bf16.msra.mxu0 0
        %470 = vmatprep.subr.bf16.mxu0 0
        %471 = vmatpush1.bf16.msra.mxu0 0
        %472 = vmatprep.subr.bf16.mxu0 0
        %473 = vmatpush1.bf16.msra.mxu0 0
        %474 = vmatprep.subr.bf16.mxu0 0
        %475 = vmatpush1.bf16.msra.mxu0 0
        %476 = vmatprep.mubr.bf16.mxu0 0
        %477 = vmatmul.mubr.bf16.gmra.mrb[0].mxu0 %v423
        %v478 = vpop.f32.mrb[0].mxu0
        %v479 = vadd.f32 0.0, %v478
        %v480 = vpop.f32.mrb[0].mxu0
        %v481 = vadd.f32 0.0, %v480
        %v482 = vpop.f32.mrb[0].mxu0
        %v483 = vpop.f32.mrb[0].mxu0
        %484 = vdwg.mxu0
        %485 = vmatprep.subr.bf16.mxu0 %v436
        %486 = vmatpush1.bf16.msra.mxu0 %v433
        %487 = vmatprep.subr.bf16.mxu0 0
        %488 = vmatpush1.bf16.msra.mxu0 0
        %489 = vmatprep.subr.bf16.mxu0 0
        %490 = vmatpush1.bf16.msra.mxu0 0
        %491 = vmatprep.subr.bf16.mxu0 0
        %492 = vmatpush1.bf16.msra.mxu0 0
        %493 = vmatprep.subr.bf16.mxu0 0
        %494 = vmatpush1.bf16.msra.mxu0 0
        %495 = vmatprep.subr.bf16.mxu0 0
        %496 = vmatpush1.bf16.msra.mxu0 0
        %497 = vmatprep.subr.bf16.mxu0 0
        %498 = vmatpush1.bf16.msra.mxu0 0
        %499 = vmatprep.subr.bf16.mxu0 0
        %500 = vmatpush1.bf16.msra.mxu0 0
        %501 = vmatprep.subr.bf16.mxu0 0
        %502 = vmatpush1.bf16.msra.mxu0 0
        %503 = vmatprep.subr.bf16.mxu0 0
        %504 = vmatpush1.bf16.msra.mxu0 0
        %505 = vmatprep.subr.bf16.mxu0 0
        %506 = vmatpush1.bf16.msra.mxu0 0
        %507 = vmatprep.subr.bf16.mxu0 0
        %508 = vmatpush1.bf16.msra.mxu0 0
        %509 = vmatprep.subr.bf16.mxu0 0
        %510 = vmatpush1.bf16.msra.mxu0 0
        %511 = vmatprep.subr.bf16.mxu0 0
        %512 = vmatpush1.bf16.msra.mxu0 0
        %513 = vmatprep.subr.bf16.mxu0 0
        %514 = vmatpush1.bf16.msra.mxu0 0
        %515 = vmatprep.subr.bf16.mxu0 0
        %516 = vmatpush1.bf16.msra.mxu0 0
        %517 = vmatprep.mubr.bf16.mxu0 0
        %518 = vmatmul.mubr.bf16.gmra.mrb[0].mxu0 %v423
        %v519 = vpop.f32.mrb[0].mxu0
        %v520 = vadd.f32 0.0, %v519
        %v521 = vpop.f32.mrb[0].mxu0
        %v522 = vadd.f32 0.0, %v521
        %v523 = vpop.f32.mrb[0].mxu0
        %v524 = vpop.f32.mrb[0].mxu0
        %525 = vdwg.mxu0
        %526 = vmatprep.subr.bf16.mxu0 %v442
        %527 = vmatpush1.bf16.msra.mxu0 %v439
        %528 = vmatprep.subr.bf16.mxu0 0
        %529 = vmatpush1.bf16.msra.mxu0 0
        %530 = vmatprep.subr.bf16.mxu0 0
        %531 = vmatpush1.bf16.msra.mxu0 0
        %532 = vmatprep.subr.bf16.mxu0 0
        %533 = vmatpush1.bf16.msra.mxu0 0
        %534 = vmatprep.subr.bf16.mxu0 0
        %535 = vmatpush1.bf16.msra.mxu0 0
        %536 = vmatprep.subr.bf16.mxu0 0
        %537 = vmatpush1.bf16.msra.mxu0 0
        %538 = vmatprep.subr.bf16.mxu0 0
        %539 = vmatpush1.bf16.msra.mxu0 0
        %540 = vmatprep.subr.bf16.mxu0 0
        %541 = vmatpush1.bf16.msra.mxu0 0
        %542 = vmatprep.subr.bf16.mxu0 0
        %543 = vmatpush1.bf16.msra.mxu0 0
        %544 = vmatprep.subr.bf16.mxu0 0
        %545 = vmatpush1.bf16.msra.mxu0 0
        %546 = vmatprep.subr.bf16.mxu0 0
        %547 = vmatpush1.bf16.msra.mxu0 0
        %548 = vmatprep.subr.bf16.mxu0 0
        %549 = vmatpush1.bf16.msra.mxu0 0
        %550 = vmatprep.subr.bf16.mxu0 0
        %551 = vmatpush1.bf16.msra.mxu0 0
        %552 = vmatprep.subr.bf16.mxu0 0
        %553 = vmatpush1.bf16.msra.mxu0 0
        %554 = vmatprep.subr.bf16.mxu0 0
        %555 = vmatpush1.bf16.msra.mxu0 0
        %556 = vmatprep.subr.bf16.mxu0 0
        %557 = vmatpush1.bf16.msra.mxu0 0
        %558 = vmatprep.mubr.bf16.mxu0 0
        %559 = vmatmul.mubr.bf16.gmra.mrb[0].mxu0 %v423
        %v560 = vpop.f32.mrb[0].mxu0
        %v561 = vadd.f32 0.0, %v560
        %v562 = vpop.f32.mrb[0].mxu0
        %v563 = vadd.f32 0.0, %v562
        %v564 = vpop.f32.mrb[0].mxu0
        %v565 = vpop.f32.mrb[0].mxu0
        %566 = vdwg.mxu0
        %v567 = vpack.c.bf16 %v479, %v479
        %v568 = vpack.c.bf16 %v481, %v481
        %v569 = vpack.c.bf16 %v520, %v520
        %v570 = vpack.c.bf16 %v522, %v522
        %v571 = vpack.c.bf16 %v561, %v561
        %v572 = vpack.c.bf16 %v563, %v563
        %vm573 = vcmask 64512
        %v575 = vsel %vm573, %v367, 0
        %vm577 = vcmask 1043456
        %v579 = vsel %vm577, %v569, 0
        %v582 = vsel %vm577, %v570, 0
        %584 = vmatprep.subr.bf16.mxu0 %v582
        %585 = vmatpush1.bf16.msra.mxu0 %v579
        %586 = vmatprep.subr.bf16.mxu0 0
        %587 = vmatpush1.bf16.msra.mxu0 0
        %588 = vmatprep.subr.bf16.mxu0 0
        %589 = vmatpush1.bf16.msra.mxu0 0
        %590 = vmatprep.subr.bf16.mxu0 0
        %591 = vmatpush1.bf16.msra.mxu0 0
        %592 = vmatprep.subr.bf16.mxu0 0
        %593 = vmatpush1.bf16.msra.mxu0 0
        %594 = vmatprep.subr.bf16.mxu0 0
        %595 = vmatpush1.bf16.msra.mxu0 0
        %596 = vmatprep.subr.bf16.mxu0 0
        %597 = vmatpush1.bf16.msra.mxu0 0
        %598 = vmatprep.subr.bf16.mxu0 0
        %599 = vmatpush1.bf16.msra.mxu0 0
        %600 = vmatprep.subr.bf16.mxu0 0
        %601 = vmatpush1.bf16.msra.mxu0 0
        %602 = vmatprep.subr.bf16.mxu0 0
        %603 = vmatpush1.bf16.msra.mxu0 0
        %604 = vmatprep.subr.bf16.mxu0 0
        %605 = vmatpush1.bf16.msra.mxu0 0
        %606 = vmatprep.subr.bf16.mxu0 0
        %607 = vmatpush1.bf16.msra.mxu0 0
        %608 = vmatprep.subr.bf16.mxu0 0
        %609 = vmatpush1.bf16.msra.mxu0 0
        %610 = vmatprep.subr.bf16.mxu0 0
        %611 = vmatpush1.bf16.msra.mxu0 0
        %612 = vmatprep.subr.bf16.mxu0 0
        %613 = vmatpush1.bf16.msra.mxu0 0
        %614 = vmatprep.subr.bf16.mxu0 0
        %615 = vmatpush1.bf16.msra.mxu0 0
        %616 = vmatprep.mubr.bf16.mxu0 0
        %617 = vmatmul.mubr.bf16.gmra.mrb[0].mxu0 %v575
        %v618 = vpop.f32.mrb[0].mxu0
        %v619 = vadd.f32 0.0, %v618
        %v620 = vpop.f32.mrb[0].mxu0
        %v621 = vadd.f32 0.0, %v620
        %v622 = vpop.f32.mrb[0].mxu0
        %v623 = vpop.f32.mrb[0].mxu0
        %624 = vdwg.mxu0
        %v626 = vsel %vm573, %v353, 0
        %v629 = vsel %vm577, %v567, 0
        %v632 = vsel %vm577, %v568, 0
        %634 = vmatprep.subr.bf16.mxu0 %v632
        %635 = vmatpush1.bf16.msra.mxu0 %v629
        %636 = vmatprep.subr.bf16.mxu0 0
        %637 = vmatpush1.bf16.msra.mxu0 0
        %638 = vmatprep.subr.bf16.mxu0 0
        %639 = vmatpush1.bf16.msra.mxu0 0
        %640 = vmatprep.subr.bf16.mxu0 0
        %641 = vmatpush1.bf16.msra.mxu0 0
        %642 = vmatprep.subr.bf16.mxu0 0
        %643 = vmatpush1.bf16.msra.mxu0 0
        %644 = vmatprep.subr.bf16.mxu0 0
        %645 = vmatpush1.bf16.msra.mxu0 0
        %646 = vmatprep.subr.bf16.mxu0 0
        %647 = vmatpush1.bf16.msra.mxu0 0
        %648 = vmatprep.subr.bf16.mxu0 0
        %649 = vmatpush1.bf16.msra.mxu0 0
        %650 = vmatprep.subr.bf16.mxu0 0
        %651 = vmatpush1.bf16.msra.mxu0 0
        %652 = vmatprep.subr.bf16.mxu0 0
        %653 = vmatpush1.bf16.msra.mxu0 0
        %654 = vmatprep.subr.bf16.mxu0 0
        %655 = vmatpush1.bf16.msra.mxu0 0
        %656 = vmatprep.subr.bf16.mxu0 0
        %657 = vmatpush1.bf16.msra.mxu0 0
        %658 = vmatprep.subr.bf16.mxu0 0
        %659 = vmatpush1.bf16.msra.mxu0 0
        %660 = vmatprep.subr.bf16.mxu0 0
        %661 = vmatpush1.bf16.msra.mxu0 0
        %662 = vmatprep.subr.bf16.mxu0 0
        %663 = vmatpush1.bf16.msra.mxu0 0
        %664 = vmatprep.subr.bf16.mxu0 0
        %665 = vmatpush1.bf16.msra.mxu0 0
        %666 = vmatprep.mubr.bf16.mxu0 0
        %667 = vmatmul.mubr.bf16.gmra.mrb[0].mxu0 %v626
        %v668 = vpop.f32.mrb[0].mxu0
        %v669 = vadd.f32 %v619, %v668
        %v670 = vpop.f32.mrb[0].mxu0
        %v671 = vadd.f32 %v621, %v670
        %v672 = vpop.f32.mrb[0].mxu0
        %v673 = vpop.f32.mrb[0].mxu0
        %674 = vdwg.mxu0
        %v676 = vsel %vm573, %v381, 0
        %v679 = vsel %vm577, %v571, 0
        %v682 = vsel %vm577, %v572, 0
        %684 = vmatprep.subr.bf16.mxu0 %v682
        %685 = vmatpush1.bf16.msra.mxu0 %v679
        %686 = vmatprep.subr.bf16.mxu0 0
        %687 = vmatpush1.bf16.msra.mxu0 0
        %688 = vmatprep.subr.bf16.mxu0 0
        %689 = vmatpush1.bf16.msra.mxu0 0
        %690 = vmatprep.subr.bf16.mxu0 0
        %691 = vmatpush1.bf16.msra.mxu0 0
        %692 = vmatprep.subr.bf16.mxu0 0
        %693 = vmatpush1.bf16.msra.mxu0 0
        %694 = vmatprep.subr.bf16.mxu0 0
        %695 = vmatpush1.bf16.msra.mxu0 0
        %696 = vmatprep.subr.bf16.mxu0 0
        %697 = vmatpush1.bf16.msra.mxu0 0
        %698 = vmatprep.subr.bf16.mxu0 0
        %699 = vmatpush1.bf16.msra.mxu0 0
        %700 = vmatprep.subr.bf16.mxu0 0
        %701 = vmatpush1.bf16.msra.mxu0 0
        %702 = vmatprep.subr.bf16.mxu0 0
        %703 = vmatpush1.bf16.msra.mxu0 0
        %704 = vmatprep.subr.bf16.mxu0 0
        %705 = vmatpush1.bf16.msra.mxu0 0
        %706 = vmatprep.subr.bf16.mxu0 0
        %707 = vmatpush1.bf16.msra.mxu0 0
        %708 = vmatprep.subr.bf16.mxu0 0
        %709 = vmatpush1.bf16.msra.mxu0 0
        %710 = vmatprep.subr.bf16.mxu0 0
        %711 = vmatpush1.bf16.msra.mxu0 0
        %712 = vmatprep.subr.bf16.mxu0 0
        %713 = vmatpush1.bf16.msra.mxu0 0
        %714 = vmatprep.subr.bf16.mxu0 0
        %715 = vmatpush1.bf16.msra.mxu0 0
        %716 = vmatprep.mubr.bf16.mxu0 0
        %717 = vmatmul.mubr.bf16.gmra.mrb[0].mxu0 %v676
        %v718 = vpop.f32.mrb[0].mxu0
        %v719 = vadd.f32 0.0, %v718
        %v720 = vpop.f32.mrb[0].mxu0
        %v721 = vadd.f32 0.0, %v720
        %v722 = vpop.f32.mrb[0].mxu0
        %v723 = vpop.f32.mrb[0].mxu0
        %724 = vdwg.mxu0
        %v725 = vadd.f32 %v669, %v719
        %v726 = vadd.f32 %v671, %v721
        %v727 = vld [vmem:[%s3] sm:$0x3]
        %v729 = vlaneseq
        %v730 = vshrl.u32 %v729, 7
        %v731 = vsub.s32 0, %v730
        %v732 = vrot.slane %v727, %v731
        %v733 = vlaneseq
        %v734 = vshrl.u32 %v733, 7
        %v735 = vsub.s32 1, %v734
        %v736 = vrot.slane %v727, %v735
        %v739 = vadd.f32 %v725, %v732
        %v740 = vadd.f32 %v726, %v736
        %v741 = vmul.f32 %v739, %v390
        %v742 = vmul.f32 %v740, %v390
        %v743 = vadd.f32 %v741, %v742
        %744 = vadd.xlane.f32.xlu0 %v743
        %v745 = vpop.xlane.xlu0 %744
        %v746 = vrot.slane %v745, 4
        %v747 = vadd.f32 %v745, %v746
        %v748 = vrot.slane %v747, 2
        %v749 = vadd.f32 %v747, %v748
        %v750 = vrot.slane %v749, 1
        %v751 = vadd.f32 %v749, %v750
        %v752 = vmul.f32 %v741, %v741
        %v753 = vmul.f32 %v742, %v742
        %v754 = vadd.f32 %v752, %v753
        %755 = vadd.xlane.f32.xlu0 %v754
        %v756 = vpop.xlane.xlu0 %755
        %v757 = vrot.slane %v756, 4
        %v758 = vadd.f32 %v756, %v757
        %v759 = vrot.slane %v758, 2
        %v760 = vadd.f32 %v758, %v759
        %v761 = vrot.slane %v760, 1
        %v762 = vadd.f32 %v760, %v761
        %v763 = vmul.f32 %v751, 0.00048828125
        %v764 = vmul.f32 %v763, 2048.0
        %v765 = vmul.f32 %v764, %v763
        %v766 = vsub.f32 %v762, %v765
        %v767 = vmul.f32 %v766, 0.0004885198
        %v768 = vmax.f32 %v767, 0.0
        %v769 = vrsqrt.pop %v768
        %v770 = vmul.f32 %v768, %v769
        %vm771 = vcmp.eq.f32.partialorder %v768, inf
        %v772 = vsel %vm771, %v768, %v770
        %vm773 = vcmp.eq.f32.partialorder %v768, 0.0
        %v774 = vand.u32 %v768, 2147483648
        %v775 = vsel %vm773, %v774, %v772
        %v776 = vadd.f32 %v775, 1e-05
        %v777 = vrcp.pop %v776
        %v778 = vsub.f32 %v741, %v763
        %v779 = vsub.f32 %v742, %v763
        %v780 = vmul.f32 %v778, %v777
        %v781 = vmul.f32 %v779, %v777
        %vm782 = vcmp.gt.f32.partialorder %v780, 0.0
        %vm783 = vcmp.gt.f32.partialorder %v781, 0.0
        %v784 = vmul.f32 %v780, 0.01
        %v785 = vmul.f32 %v781, 0.01
        %v786 = vsel %vm782, %v780, %v784
        %v787 = vsel %vm783, %v781, %v785
        %v788 = vpack.c.bf16 %v786, %v786
        %v789 = vpack.c.bf16 %v787, %v787
        %v790 = vld [vmem:[#allocation2] sm:$0xff]
        %v791 = vld [vmem:[#allocation2 + $0x8] sm:$0xf]
        %v792 = vld [vmem:[#allocation2 + $0xc] sm:$0xff]
        %v793 = vld [vmem:[#allocation2 + $0x14] sm:$0xf]
        %v794 = vld [vmem:[#allocation2 + $0x18] sm:$0xff]
        %v795 = vld [vmem:[#allocation2 + $0x20] sm:$0xf]
        %v796 = vld [vmem:[#allocation2 + $0x24] sm:$0xff]
        %v797 = vld [vmem:[#allocation2 + $0x2c] sm:$0xf]
        %v798 = vld [vmem:[#allocation2 + $0x30] sm:$0xff]
        %v799 = vld [vmem:[#allocation2 + $0x38] sm:$0xf]
        %v800 = vld [vmem:[#allocation2 + $0x3c] sm:$0xff]
        %v801 = vld [vmem:[#allocation2 + $0x44] sm:$0xf]
        %v802 = vld [vmem:[#allocation2 + $0x48] sm:$0xff]
        %v803 = vld [vmem:[#allocation2 + $0x50] sm:$0xf]
        %v804 = vld [vmem:[#allocation2 + $0x54] sm:$0xff]
        %v805 = vld [vmem:[#allocation2 + $0x5c] sm:$0xf]
        %v806 = vld [vmem:[#allocation2 + $0x60] sm:$0xff]
        %v807 = vld [vmem:[#allocation2 + $0x68] sm:$0xf]
        %v808 = vld [vmem:[#allocation2 + $0x6c] sm:$0xff]
        %v809 = vld [vmem:[#allocation2 + $0x74] sm:$0xf]
        %v810 = vld [vmem:[#allocation2 + $0x78] sm:$0xff]
        %v811 = vld [vmem:[#allocation2 + $0x80] sm:$0xf]
        %v812 = vld [vmem:[#allocation2 + $0x84] sm:$0xff]
        %v813 = vld [vmem:[#allocation2 + $0x8c] sm:$0xf]
        %v814 = vld [vmem:[#allocation2 + $0x90] sm:$0xff]
        %v815 = vld [vmem:[#allocation2 + $0x98] sm:$0xf]
        %v816 = vld [vmem:[#allocation2 + $0x9c] sm:$0xff]
        %v817 = vld [vmem:[#allocation2 + $0xa4] sm:$0xf]
        %v818 = vld [vmem:[#allocation2 + $0xa8] sm:$0xff]
        %v819 = vld [vmem:[#allocation2 + $0xb0] sm:$0xf]
        %v820 = vld [vmem:[#allocation2 + $0xb4] sm:$0xff]
        %v821 = vld [vmem:[#allocation2 + $0xbc] sm:$0xf]
        %v822 = vld [vmem:[#allocation2 + $0xc0] sm:$0xff]
        %v823 = vld [vmem:[#allocation2 + $0xc8] sm:$0xf]
        %v824 = vld [vmem:[#allocation2 + $0xcc] sm:$0xff]
        %v825 = vld [vmem:[#allocation2 + $0xd4] sm:$0xf]
        %v826 = vld [vmem:[#allocation2 + $0xd8] sm:$0xff]
        %v827 = vld [vmem:[#allocation2 + $0xe0] sm:$0xf]
        %v828 = vld [vmem:[#allocation2 + $0xe4] sm:$0xff]
        %v829 = vld [vmem:[#allocation2 + $0xec] sm:$0xf]
        %v830 = vld [vmem:[#allocation2 + $0xf0] sm:$0xff]
        %v831 = vld [vmem:[#allocation2 + $0xf8] sm:$0xf]
        %v832 = vld [vmem:[#allocation2 + $0xfc] sm:$0xff]
        %v833 = vld [vmem:[#allocation2 + $0x104] sm:$0xf]
        %v834 = vld [vmem:[#allocation2 + $0x108] sm:$0xff]
        %v835 = vld [vmem:[#allocation2 + $0x110] sm:$0xf]
        %v836 = vld [vmem:[#allocation2 + $0x114] sm:$0xff]
        %v837 = vld [vmem:[#allocation2 + $0x11c] sm:$0xf]
        %v838 = vld [vmem:[#allocation2 + $0x120] sm:$0xff]
        %v839 = vld [vmem:[#allocation2 + $0x128] sm:$0xf]
        %v840 = vld [vmem:[#allocation2 + $0x12c] sm:$0xff]
        %v841 = vld [vmem:[#allocation2 + $0x134] sm:$0xf]
        %v842 = vld [vmem:[#allocation2 + $0x138] sm:$0xff]
        %v843 = vld [vmem:[#allocation2 + $0x140] sm:$0xf]
        %v844 = vld [vmem:[#allocation2 + $0x144] sm:$0xff]
        %v845 = vld [vmem:[#allocation2 + $0x14c] sm:$0xf]
        %v846 = vld [vmem:[#allocation2 + $0x150] sm:$0xff]
        %v847 = vld [vmem:[#allocation2 + $0x158] sm:$0xf]
        %v848 = vld [vmem:[#allocation2 + $0x15c] sm:$0xff]
        %v849 = vld [vmem:[#allocation2 + $0x164] sm:$0xf]
        %v850 = vld [vmem:[#allocation2 + $0x168] sm:$0xff]
        %v851 = vld [vmem:[#allocation2 + $0x170] sm:$0xf]
        %v852 = vld [vmem:[#allocation2 + $0x174] sm:$0xff]
        %v853 = vld [vmem:[#allocation2 + $0x17c] sm:$0xf]
        %v918 = vunpack.c.l.b16 %v790
        %v919 = vunpack.c.h.b16 %v790
        %v920 = vunpack.c.l.b16 %v791
        %v921 = vunpack.c.l.b16 %v792
        %v922 = vunpack.c.h.b16 %v792
        %v923 = vunpack.c.l.b16 %v793
        %v924 = vunpack.c.l.b16 %v794
        %v925 = vunpack.c.h.b16 %v794
        %v926 = vunpack.c.l.b16 %v795
        %v927 = vunpack.c.l.b16 %v796
        %v928 = vunpack.c.h.b16 %v796
        %v929 = vunpack.c.l.b16 %v797
        %v930 = vunpack.c.l.b16 %v798
        %v931 = vunpack.c.h.b16 %v798
        %v932 = vunpack.c.l.b16 %v799
        %v933 = vunpack.c.l.b16 %v800
        %v934 = vunpack.c.h.b16 %v800
        %v935 = vunpack.c.l.b16 %v801
        %v936 = vunpack.c.l.b16 %v802
        %v937 = vunpack.c.h.b16 %v802
        %v938 = vunpack.c.l.b16 %v803
        %v939 = vunpack.c.l.b16 %v804
        %v940 = vunpack.c.h.b16 %v804
        %v941 = vunpack.c.l.b16 %v805
        %v942 = vunpack.c.l.b16 %v806
        %v943 = vunpack.c.h.b16 %v806
        %v944 = vunpack.c.l.b16 %v807
        %v945 = vunpack.c.l.b16 %v808
        %v946 = vunpack.c.h.b16 %v808
        %v947 = vunpack.c.l.b16 %v809
        %v948 = vunpack.c.l.b16 %v810
        %v949 = vunpack.c.h.b16 %v810
        %v950 = vunpack.c.l.b16 %v811
        %v951 = vunpack.c.l.b16 %v812
        %v952 = vunpack.c.h.b16 %v812
        %v953 = vunpack.c.l.b16 %v813
        %v954 = vunpack.c.l.b16 %v814
        %v955 = vunpack.c.h.b16 %v814
        %v956 = vunpack.c.l.b16 %v815
        %v957 = vunpack.c.l.b16 %v816
        %v958 = vunpack.c.h.b16 %v816
        %v959 = vunpack.c.l.b16 %v817
        %v960 = vunpack.c.l.b16 %v818
        %v961 = vunpack.c.h.b16 %v818
        %v962 = vunpack.c.l.b16 %v819
        %v963 = vunpack.c.l.b16 %v820
        %v964 = vunpack.c.h.b16 %v820
        %v965 = vunpack.c.l.b16 %v821
        %v966 = vunpack.c.l.b16 %v822
        %v967 = vunpack.c.h.b16 %v822
        %v968 = vunpack.c.l.b16 %v823
        %v969 = vunpack.c.l.b16 %v824
        %v970 = vunpack.c.h.b16 %v824
        %v971 = vunpack.c.l.b16 %v825
        %v972 = vunpack.c.l.b16 %v826
        %v973 = vunpack.c.h.b16 %v826
        %v974 = vunpack.c.l.b16 %v827
        %v975 = vunpack.c.l.b16 %v828
        %v976 = vunpack.c.h.b16 %v828
        %v977 = vunpack.c.l.b16 %v829
        %v978 = vunpack.c.l.b16 %v830
        %v979 = vunpack.c.h.b16 %v830
        %v980 = vunpack.c.l.b16 %v831
        %v981 = vunpack.c.l.b16 %v832
        %v982 = vunpack.c.h.b16 %v832
        %v983 = vunpack.c.l.b16 %v833
        %v984 = vunpack.c.l.b16 %v834
        %v985 = vunpack.c.h.b16 %v834
        %v986 = vunpack.c.l.b16 %v835
        %v987 = vunpack.c.l.b16 %v836
        %v988 = vunpack.c.h.b16 %v836
        %v989 = vunpack.c.l.b16 %v837
        %v990 = vunpack.c.l.b16 %v838
        %v991 = vunpack.c.h.b16 %v838
        %v992 = vunpack.c.l.b16 %v839
        %v993 = vunpack.c.l.b16 %v840
        %v994 = vunpack.c.h.b16 %v840
        %v995 = vunpack.c.l.b16 %v841
        %v996 = vunpack.c.l.b16 %v842
        %v997 = vunpack.c.h.b16 %v842
        %v998 = vunpack.c.l.b16 %v843
        %v999 = vunpack.c.l.b16 %v844
        %v1000 = vunpack.c.h.b16 %v844
        %v1001 = vunpack.c.l.b16 %v845
        %v1002 = vunpack.c.l.b16 %v846
        %v1003 = vunpack.c.h.b16 %v846
        %v1004 = vunpack.c.l.b16 %v847
        %v1005 = vunpack.c.l.b16 %v848
        %v1006 = vunpack.c.h.b16 %v848
        %v1007 = vunpack.c.l.b16 %v849
        %v1008 = vunpack.c.l.b16 %v850
        %v1009 = vunpack.c.h.b16 %v850
        %v1010 = vunpack.c.l.b16 %v851
        %v1011 = vunpack.c.l.b16 %v852
        %v1012 = vunpack.c.h.b16 %v852
        %v1013 = vunpack.c.l.b16 %v853
        %v1014 = vpack.c.b16 %v921, %v918
        %v1015 = vpack.c.b16 %v922, %v919
        %v1016 = vpack.c.b16 %v923, %v920
        %v1017 = vpack.c.b16 %v927, %v924
        %v1018 = vpack.c.b16 %v928, %v925
        %v1019 = vpack.c.b16 %v929, %v926
        %v1020 = vpack.c.b16 %v933, %v930
        %v1021 = vpack.c.b16 %v934, %v931
        %v1022 = vpack.c.b16 %v935, %v932
        %v1023 = vpack.c.b16 %v939, %v936
        %v1024 = vpack.c.b16 %v940, %v937
        %v1025 = vpack.c.b16 %v941, %v938
        %v1026 = vpack.c.b16 %v945, %v942
        %v1027 = vpack.c.b16 %v946, %v943
        %v1028 = vpack.c.b16 %v947, %v944
        %v1029 = vpack.c.b16 %v951, %v948
        %v1030 = vpack.c.b16 %v952, %v949
        %v1031 = vpack.c.b16 %v953, %v950
        %v1032 = vpack.c.b16 %v957, %v954
        %v1033 = vpack.c.b16 %v958, %v955
        %v1034 = vpack.c.b16 %v959, %v956
        %v1035 = vpack.c.b16 %v963, %v960
        %v1036 = vpack.c.b16 %v964, %v961
        %v1037 = vpack.c.b16 %v965, %v962
        %v1038 = vpack.c.b16 %v969, %v966
        %v1039 = vpack.c.b16 %v970, %v967
        %v1040 = vpack.c.b16 %v971, %v968
        %v1041 = vpack.c.b16 %v975, %v972
        %v1042 = vpack.c.b16 %v976, %v973
        %v1043 = vpack.c.b16 %v977, %v974
        %v1044 = vpack.c.b16 %v981, %v978
        %v1045 = vpack.c.b16 %v982, %v979
        %v1046 = vpack.c.b16 %v983, %v980
        %v1047 = vpack.c.b16 %v987, %v984
        %v1048 = vpack.c.b16 %v988, %v985
        %v1049 = vpack.c.b16 %v989, %v986
        %v1050 = vpack.c.b16 %v993, %v990
        %v1051 = vpack.c.b16 %v994, %v991
        %v1052 = vpack.c.b16 %v995, %v992
        %v1053 = vpack.c.b16 %v999, %v996
        %v1054 = vpack.c.b16 %v1000, %v997
        %v1055 = vpack.c.b16 %v1001, %v998
        %v1056 = vpack.c.b16 %v1005, %v1002
        %v1057 = vpack.c.b16 %v1006, %v1003
        %v1058 = vpack.c.b16 %v1007, %v1004
        %v1059 = vpack.c.b16 %v1011, %v1008
        %v1060 = vpack.c.b16 %v1012, %v1009
        %v1061 = vpack.c.b16 %v1013, %v1010
        %1110 = vmatprep.subr.bf16.mxu0 %v1015
        %1111 = vmatpush1.bf16.msra.mxu0 %v1014
        %1112 = vmatprep.subr.bf16.mxu0 %v1018
        %1113 = vmatpush1.bf16.msra.mxu0 %v1017
        %1114 = vmatprep.subr.bf16.mxu0 %v1021
        %1115 = vmatpush1.bf16.msra.mxu0 %v1020
        %1116 = vmatprep.subr.bf16.mxu0 %v1024
        %1117 = vmatpush1.bf16.msra.mxu0 %v1023
        %1118 = vmatprep.subr.bf16.mxu0 %v1027
        %1119 = vmatpush1.bf16.msra.mxu0 %v1026
        %1120 = vmatprep.subr.bf16.mxu0 %v1030
        %1121 = vmatpush1.bf16.msra.mxu0 %v1029
        %1122 = vmatprep.subr.bf16.mxu0 %v1033
        %1123 = vmatpush1.bf16.msra.mxu0 %v1032
        %1124 = vmatprep.subr.bf16.mxu0 %v1036
        %1125 = vmatpush1.bf16.msra.mxu0 %v1035
        %1126 = vmatprep.subr.bf16.mxu0 %v1039
        %1127 = vmatpush1.bf16.msra.mxu0 %v1038
        %1128 = vmatprep.subr.bf16.mxu0 %v1042
        %1129 = vmatpush1.bf16.msra.mxu0 %v1041
        %1130 = vmatprep.subr.bf16.mxu0 %v1045
        %1131 = vmatpush1.bf16.msra.mxu0 %v1044
        %1132 = vmatprep.subr.bf16.mxu0 %v1048
        %1133 = vmatpush1.bf16.msra.mxu0 %v1047
        %1134 = vmatprep.subr.bf16.mxu0 %v1051
        %1135 = vmatpush1.bf16.msra.mxu0 %v1050
        %1136 = vmatprep.subr.bf16.mxu0 %v1054
        %1137 = vmatpush1.bf16.msra.mxu0 %v1053
        %1138 = vmatprep.subr.bf16.mxu0 %v1057
        %1139 = vmatpush1.bf16.msra.mxu0 %v1056
        %1140 = vmatprep.subr.bf16.mxu0 %v1060
        %1141 = vmatpush1.bf16.msra.mxu0 %v1059
        %1142 = vmatprep.mubr.bf16.mxu0 %v789
        %1143 = vmatmul.mubr.bf16.gmra.mrb[0].mxu0 %v788
        %v1144 = vpop.f32.mrb[0].mxu0
        %v1145 = vadd.f32 0.0, %v1144
        %v1146 = vpop.f32.mrb[0].mxu0
        %v1147 = vadd.f32 0.0, %v1146
        %v1148 = vpop.f32.mrb[0].mxu0
        %v1149 = vpop.f32.mrb[0].mxu0
        %1150 = vdwg.mxu0
        %1151 = vmatprep.subr.bf16.mxu0 0
        %1152 = vmatpush1.bf16.msra.mxu0 %v1016
        %1153 = vmatprep.subr.bf16.mxu0 0
        %1154 = vmatpush1.bf16.msra.mxu0 %v1019
        %1155 = vmatprep.subr.bf16.mxu0 0
        %1156 = vmatpush1.bf16.msra.mxu0 %v1022
        %1157 = vmatprep.subr.bf16.mxu0 0
        %1158 = vmatpush1.bf16.msra.mxu0 %v1025
        %1159 = vmatprep.subr.bf16.mxu0 0
        %1160 = vmatpush1.bf16.msra.mxu0 %v1028
        %1161 = vmatprep.subr.bf16.mxu0 0
        %1162 = vmatpush1.bf16.msra.mxu0 %v1031
        %1163 = vmatprep.subr.bf16.mxu0 0
        %1164 = vmatpush1.bf16.msra.mxu0 %v1034
        %1165 = vmatprep.subr.bf16.mxu0 0
        %1166 = vmatpush1.bf16.msra.mxu0 %v1037
        %1167 = vmatprep.subr.bf16.mxu0 0
        %1168 = vmatpush1.bf16.msra.mxu0 %v1040
        %1169 = vmatprep.subr.bf16.mxu0 0
        %1170 = vmatpush1.bf16.msra.mxu0 %v1043
        %1171 = vmatprep.subr.bf16.mxu0 0
        %1172 = vmatpush1.bf16.msra.mxu0 %v1046
        %1173 = vmatprep.subr.bf16.mxu0 0
        %1174 = vmatpush1.bf16.msra.mxu0 %v1049
        %1175 = vmatprep.subr.bf16.mxu0 0
        %1176 = vmatpush1.bf16.msra.mxu0 %v1052
        %1177 = vmatprep.subr.bf16.mxu0 0
        %1178 = vmatpush1.bf16.msra.mxu0 %v1055
        %1179 = vmatprep.subr.bf16.mxu0 0
        %1180 = vmatpush1.bf16.msra.mxu0 %v1058
        %1181 = vmatprep.subr.bf16.mxu0 0
        %1182 = vmatpush1.bf16.msra.mxu0 %v1061
        %1183 = vmatprep.mubr.bf16.mxu0 %v789
        %1184 = vmatmul.mubr.bf16.gmra.mrb[0].mxu0 %v788
        %v1185 = vpop.f32.mrb[0].mxu0
        %v1186 = vadd.f32 0.0, %v1185
        %v1187 = vpop.f32.mrb[0].mxu0
        %v1188 = vpop.f32.mrb[0].mxu0
        %v1189 = vpop.f32.mrb[0].mxu0
        %1190 = vdwg.mxu0
        %v1191 = vpack.c.bf16 %v1145, %v1145
        %v1192 = vpack.c.bf16 %v1147, %v1147
        %v1193 = vpack.c.bf16 %v1186, %v1186
        %v1195 = vsel %vm577, %v1192, 0
        %1197 = vmatprep.subr.bf16.mxu0 0
        %1198 = vmatpush1.bf16.msra.mxu0 %v1195
        %1199 = vmatprep.subr.bf16.mxu0 0
        %1200 = vmatpush1.bf16.msra.mxu0 0
        %1201 = vmatprep.subr.bf16.mxu0 0
        %1202 = vmatpush1.bf16.msra.mxu0 0
        %1203 = vmatprep.subr.bf16.mxu0 0
        %1204 = vmatpush1.bf16.msra.mxu0 0
        %1205 = vmatprep.subr.bf16.mxu0 0
        %1206 = vmatpush1.bf16.msra.mxu0 0
        %1207 = vmatprep.subr.bf16.mxu0 0
        %1208 = vmatpush1.bf16.msra.mxu0 0
        %1209 = vmatprep.subr.bf16.mxu0 0
        %1210 = vmatpush1.bf16.msra.mxu0 0
        %1211 = vmatprep.subr.bf16.mxu0 0
        %1212 = vmatpush1.bf16.msra.mxu0 0
        %1213 = vmatprep.subr.bf16.mxu0 0
        %1214 = vmatpush1.bf16.msra.mxu0 0
        %1215 = vmatprep.subr.bf16.mxu0 0
        %1216 = vmatpush1.bf16.msra.mxu0 0
        %1217 = vmatprep.subr.bf16.mxu0 0
        %1218 = vmatpush1.bf16.msra.mxu0 0
        %1219 = vmatprep.subr.bf16.mxu0 0
        %1220 = vmatpush1.bf16.msra.mxu0 0
        %1221 = vmatprep.subr.bf16.mxu0 0
        %1222 = vmatpush1.bf16.msra.mxu0 0
        %1223 = vmatprep.subr.bf16.mxu0 0
        %1224 = vmatpush1.bf16.msra.mxu0 0
        %1225 = vmatprep.subr.bf16.mxu0 0
        %1226 = vmatpush1.bf16.msra.mxu0 0
        %1227 = vmatprep.subr.bf16.mxu0 0
        %1228 = vmatpush1.bf16.msra.mxu0 0
        %1229 = vmatprep.mubr.bf16.mxu0 0
        %1230 = vmatmul.mubr.bf16.gmra.mrb[0].mxu0 %v575
        %v1231 = vpop.f32.mrb[0].mxu0
        %v1232 = vadd.f32 0.0, %v1231
        %v1233 = vpop.f32.mrb[0].mxu0
        %v1234 = vpop.f32.mrb[0].mxu0
        %v1235 = vpop.f32.mrb[0].mxu0
        %1236 = vdwg.mxu0
        %v1238 = vsel %vm577, %v1191, 0
        %1240 = vmatprep.subr.bf16.mxu0 0
        %1241 = vmatpush1.bf16.msra.mxu0 %v1238
        %1242 = vmatprep.subr.bf16.mxu0 0
        %1243 = vmatpush1.bf16.msra.mxu0 0
        %1244 = vmatprep.subr.bf16.mxu0 0
        %1245 = vmatpush1.bf16.msra.mxu0 0
        %1246 = vmatprep.subr.bf16.mxu0 0
        %1247 = vmatpush1.bf16.msra.mxu0 0
        %1248 = vmatprep.subr.bf16.mxu0 0
        %1249 = vmatpush1.bf16.msra.mxu0 0
        %1250 = vmatprep.subr.bf16.mxu0 0
        %1251 = vmatpush1.bf16.msra.mxu0 0
        %1252 = vmatprep.subr.bf16.mxu0 0
        %1253 = vmatpush1.bf16.msra.mxu0 0
        %1254 = vmatprep.subr.bf16.mxu0 0
        %1255 = vmatpush1.bf16.msra.mxu0 0
        %1256 = vmatprep.subr.bf16.mxu0 0
        %1257 = vmatpush1.bf16.msra.mxu0 0
        %1258 = vmatprep.subr.bf16.mxu0 0
        %1259 = vmatpush1.bf16.msra.mxu0 0
        %1260 = vmatprep.subr.bf16.mxu0 0
        %1261 = vmatpush1.bf16.msra.mxu0 0
        %1262 = vmatprep.subr.bf16.mxu0 0
        %1263 = vmatpush1.bf16.msra.mxu0 0
        %1264 = vmatprep.subr.bf16.mxu0 0
        %1265 = vmatpush1.bf16.msra.mxu0 0
        %1266 = vmatprep.subr.bf16.mxu0 0
        %1267 = vmatpush1.bf16.msra.mxu0 0
        %1268 = vmatprep.subr.bf16.mxu0 0
        %1269 = vmatpush1.bf16.msra.mxu0 0
        %1270 = vmatprep.subr.bf16.mxu0 0
        %1271 = vmatpush1.bf16.msra.mxu0 0
        %1272 = vmatprep.mubr.bf16.mxu0 0
        %1273 = vmatmul.mubr.bf16.gmra.mrb[0].mxu0 %v626
        %v1274 = vpop.f32.mrb[0].mxu0
        %v1275 = vadd.f32 %v1232, %v1274
        %v1276 = vpop.f32.mrb[0].mxu0
        %v1277 = vpop.f32.mrb[0].mxu0
        %v1278 = vpop.f32.mrb[0].mxu0
        %1279 = vdwg.mxu0
        %v1281 = vsel %vm577, %v1193, 0
        %1283 = vmatprep.subr.bf16.mxu0 0
        %1284 = vmatpush1.bf16.msra.mxu0 %v1281
        %1285 = vmatprep.subr.bf16.mxu0 0
        %1286 = vmatpush1.bf16.msra.mxu0 0
        %1287 = vmatprep.subr.bf16.mxu0 0
        %1288 = vmatpush1.bf16.msra.mxu0 0
        %1289 = vmatprep.subr.bf16.mxu0 0
        %1290 = vmatpush1.bf16.msra.mxu0 0
        %1291 = vmatprep.subr.bf16.mxu0 0
        %1292 = vmatpush1.bf16.msra.mxu0 0
        %1293 = vmatprep.subr.bf16.mxu0 0
        %1294 = vmatpush1.bf16.msra.mxu0 0
        %1295 = vmatprep.subr.bf16.mxu0 0
        %1296 = vmatpush1.bf16.msra.mxu0 0
        %1297 = vmatprep.subr.bf16.mxu0 0
        %1298 = vmatpush1.bf16.msra.mxu0 0
        %1299 = vmatprep.subr.bf16.mxu0 0
        %1300 = vmatpush1.bf16.msra.mxu0 0
        %1301 = vmatprep.subr.bf16.mxu0 0
        %1302 = vmatpush1.bf16.msra.mxu0 0
        %1303 = vmatprep.subr.bf16.mxu0 0
        %1304 = vmatpush1.bf16.msra.mxu0 0
        %1305 = vmatprep.subr.bf16.mxu0 0
        %1306 = vmatpush1.bf16.msra.mxu0 0
        %1307 = vmatprep.subr.bf16.mxu0 0
        %1308 = vmatpush1.bf16.msra.mxu0 0
        %1309 = vmatprep.subr.bf16.mxu0 0
        %1310 = vmatpush1.bf16.msra.mxu0 0
        %1311 = vmatprep.subr.bf16.mxu0 0
        %1312 = vmatpush1.bf16.msra.mxu0 0
        %1313 = vmatprep.subr.bf16.mxu0 0
        %1314 = vmatpush1.bf16.msra.mxu0 0
        %1315 = vmatprep.mubr.bf16.mxu0 0
        %1316 = vmatmul.mubr.bf16.gmra.mrb[0].mxu0 %v676
        %v1317 = vpop.f32.mrb[0].mxu0
        %v1318 = vadd.f32 0.0, %v1317
        %v1319 = vpop.f32.mrb[0].mxu0
        %v1320 = vpop.f32.mrb[0].mxu0
        %v1321 = vpop.f32.mrb[0].mxu0
        %1322 = vdwg.mxu0
        %v1323 = vadd.f32 %v1275, %v1318
        %v1324 = vld [vmem:[%s5] sm:$0x1]
        %v1326 = vlaneseq
        %v1327 = vshrl.u32 %v1326, 7
        %v1328 = vsub.s32 0, %v1327
        %v1329 = vrot.slane %v1324, %v1328
        %v1331 = vadd.f32 %v1323, %v1329
        %v1332 = vmul.f32 %v1331, %v390
        %1333 = vadd.xlane.f32.xlu0 %v1332
        %v1334 = vpop.xlane.xlu0 %1333
        %v1335 = vrot.slane %v1334, 4
        %v1336 = vadd.f32 %v1334, %v1335
        %v1337 = vrot.slane %v1336, 2
        %v1338 = vadd.f32 %v1336, %v1337
        %v1339 = vrot.slane %v1338, 1
        %v1340 = vadd.f32 %v1338, %v1339
        %v1341 = vmul.f32 %v1332, %v1332
        %1342 = vadd.xlane.f32.xlu0 %v1341
        %v1343 = vpop.xlane.xlu0 %1342
        %v1344 = vrot.slane %v1343, 4
        %v1345 = vadd.f32 %v1343, %v1344
        %v1346 = vrot.slane %v1345, 2
        %v1347 = vadd.f32 %v1345, %v1346
        %v1348 = vrot.slane %v1347, 1
        %v1349 = vadd.f32 %v1347, %v1348
        %v1350 = vmul.f32 %v1340, 0.0009765625
        %v1351 = vmul.f32 %v1350, 1024.0
        %v1352 = vmul.f32 %v1351, %v1350
        %v1353 = vsub.f32 %v1349, %v1352
        %v1354 = vmul.f32 %v1353, 0.0009775171
        %v1355 = vmax.f32 %v1354, 0.0
        %v1356 = vrsqrt.pop %v1355
        %v1357 = vmul.f32 %v1355, %v1356
        %vm1358 = vcmp.eq.f32.partialorder %v1355, inf
        %v1359 = vsel %vm1358, %v1355, %v1357
        %vm1360 = vcmp.eq.f32.partialorder %v1355, 0.0
        %v1361 = vand.u32 %v1355, 2147483648
        %v1362 = vsel %vm1360, %v1361, %v1359
        %v1363 = vadd.f32 %v1362, 1e-05
        %v1364 = vrcp.pop %v1363
        %v1365 = vsub.f32 %v1332, %v1350
        %v1366 = vmul.f32 %v1365, %v1364
        %vm1367 = vcmp.gt.f32.partialorder %v1366, 0.0
        %v1368 = vmul.f32 %v1366, 0.01
        %v1369 = vsel %vm1367, %v1366, %v1368
        %v1370 = vpack.c.bf16 %v1369, %v1369
        %v1372 = vsel %vm577, %v1370, 0
        %1374 = vmatprep.subr.bf16.mxu0 0
        %1375 = vmatpush1.bf16.msra.mxu0 %v1372
        %1376 = vmatprep.subr.bf16.mxu0 0
        %1377 = vmatpush1.bf16.msra.mxu0 0
        %1378 = vmatprep.subr.bf16.mxu0 0
        %1379 = vmatpush1.bf16.msra.mxu0 0
        %1380 = vmatprep.subr.bf16.mxu0 0
        %1381 = vmatpush1.bf16.msra.mxu0 0
        %1382 = vmatprep.subr.bf16.mxu0 0
        %1383 = vmatpush1.bf16.msra.mxu0 0
        %1384 = vmatprep.subr.bf16.mxu0 0
        %1385 = vmatpush1.bf16.msra.mxu0 0
        %1386 = vmatprep.subr.bf16.mxu0 0
        %1387 = vmatpush1.bf16.msra.mxu0 0
        %1388 = vmatprep.subr.bf16.mxu0 0
        %1389 = vmatpush1.bf16.msra.mxu0 0
        %1390 = vmatprep.subr.bf16.mxu0 0
        %1391 = vmatpush1.bf16.msra.mxu0 0
        %1392 = vmatprep.subr.bf16.mxu0 0
        %1393 = vmatpush1.bf16.msra.mxu0 0
        %1394 = vmatprep.subr.bf16.mxu0 0
        %1395 = vmatpush1.bf16.msra.mxu0 0
        %1396 = vmatprep.subr.bf16.mxu0 0
        %1397 = vmatpush1.bf16.msra.mxu0 0
        %1398 = vmatprep.subr.bf16.mxu0 0
        %1399 = vmatpush1.bf16.msra.mxu0 0
        %1400 = vmatprep.subr.bf16.mxu0 0
        %1401 = vmatpush1.bf16.msra.mxu0 0
        %1402 = vmatprep.subr.bf16.mxu0 0
        %1403 = vmatpush1.bf16.msra.mxu0 0
        %1404 = vmatprep.subr.bf16.mxu0 0
        %1405 = vmatpush1.bf16.msra.mxu0 0
        %1406 = vmatprep.mubr.bf16.mxu0 0
        %1407 = vmatmul.mubr.bf16.gmra.mrb[0].mxu0 %v626
        %v1408 = vpop.f32.mrb[0].mxu0
        %v1409 = vadd.f32 0.0, %v1408
        %v1410 = vpop.f32.mrb[0].mxu0
        %v1411 = vpop.f32.mrb[0].mxu0
        %v1412 = vpop.f32.mrb[0].mxu0
        %1413 = vdwg.mxu0
        %v1414 = vpack.c.bf16 %v1409, %v1409
        %1415 = vmatprep.subr.bf16.mxu0 0
        %1416 = vmatpush1.bf16.msra.mxu0 %v1372
        %1417 = vmatprep.subr.bf16.mxu0 0
        %1418 = vmatpush1.bf16.msra.mxu0 0
        %1419 = vmatprep.subr.bf16.mxu0 0
        %1420 = vmatpush1.bf16.msra.mxu0 0
        %1421 = vmatprep.subr.bf16.mxu0 0
        %1422 = vmatpush1.bf16.msra.mxu0 0
        %1423 = vmatprep.subr.bf16.mxu0 0
        %1424 = vmatpush1.bf16.msra.mxu0 0
        %1425 = vmatprep.subr.bf16.mxu0 0
        %1426 = vmatpush1.bf16.msra.mxu0 0
        %1427 = vmatprep.subr.bf16.mxu0 0
        %1428 = vmatpush1.bf16.msra.mxu0 0
        %1429 = vmatprep.subr.bf16.mxu0 0
        %1430 = vmatpush1.bf16.msra.mxu0 0
        %1431 = vmatprep.subr.bf16.mxu0 0
        %1432 = vmatpush1.bf16.msra.mxu0 0
        %1433 = vmatprep.subr.bf16.mxu0 0
        %1434 = vmatpush1.bf16.msra.mxu0 0
        %1435 = vmatprep.subr.bf16.mxu0 0
        %1436 = vmatpush1.bf16.msra.mxu0 0
        %1437 = vmatprep.subr.bf16.mxu0 0
        %1438 = vmatpush1.bf16.msra.mxu0 0
        %1439 = vmatprep.subr.bf16.mxu0 0
        %1440 = vmatpush1.bf16.msra.mxu0 0
        %1441 = vmatprep.subr.bf16.mxu0 0
        %1442 = vmatpush1.bf16.msra.mxu0 0
        %1443 = vmatprep.subr.bf16.mxu0 0
        %1444 = vmatpush1.bf16.msra.mxu0 0
        %1445 = vmatprep.subr.bf16.mxu0 0
        %1446 = vmatpush1.bf16.msra.mxu0 0
        %1447 = vmatprep.mubr.bf16.mxu0 0
        %1448 = vmatmul.mubr.bf16.gmra.mrb[0].mxu0 %v575
        %v1449 = vpop.f32.mrb[0].mxu0
        %v1450 = vadd.f32 0.0, %v1449
        %v1451 = vpop.f32.mrb[0].mxu0
        %v1452 = vpop.f32.mrb[0].mxu0
        %v1453 = vpop.f32.mrb[0].mxu0
        %1454 = vdwg.mxu0
        %v1455 = vpack.c.bf16 %v1450, %v1450
        %1456 = vmatprep.subr.bf16.mxu0 0
        %1457 = vmatpush1.bf16.msra.mxu0 %v1372
        %1458 = vmatprep.subr.bf16.mxu0 0
        %1459 = vmatpush1.bf16.msra.mxu0 0
        %1460 = vmatprep.subr.bf16.mxu0 0
        %1461 = vmatpush1.bf16.msra.mxu0 0
        %1462 = vmatprep.subr.bf16.mxu0 0
        %1463 = vmatpush1.bf16.msra.mxu0 0
        %1464 = vmatprep.subr.bf16.mxu0 0
        %1465 = vmatpush1.bf16.msra.mxu0 0
        %1466 = vmatprep.subr.bf16.mxu0 0
        %1467 = vmatpush1.bf16.msra.mxu0 0
        %1468 = vmatprep.subr.bf16.mxu0 0
        %1469 = vmatpush1.bf16.msra.mxu0 0
        %1470 = vmatprep.subr.bf16.mxu0 0
        %1471 = vmatpush1.bf16.msra.mxu0 0
        %1472 = vmatprep.subr.bf16.mxu0 0
        %1473 = vmatpush1.bf16.msra.mxu0 0
        %1474 = vmatprep.subr.bf16.mxu0 0
        %1475 = vmatpush1.bf16.msra.mxu0 0
        %1476 = vmatprep.subr.bf16.mxu0 0
        %1477 = vmatpush1.bf16.msra.mxu0 0
        %1478 = vmatprep.subr.bf16.mxu0 0
        %1479 = vmatpush1.bf16.msra.mxu0 0
        %1480 = vmatprep.subr.bf16.mxu0 0
        %1481 = vmatpush1.bf16.msra.mxu0 0
        %1482 = vmatprep.subr.bf16.mxu0 0
        %1483 = vmatpush1.bf16.msra.mxu0 0
        %1484 = vmatprep.subr.bf16.mxu0 0
        %1485 = vmatpush1.bf16.msra.mxu0 0
        %1486 = vmatprep.subr.bf16.mxu0 0
        %1487 = vmatpush1.bf16.msra.mxu0 0
        %1488 = vmatprep.mubr.bf16.mxu0 0
        %1489 = vmatmul.mubr.bf16.gmra.mrb[0].mxu0 %v676
        %v1490 = vpop.f32.mrb[0].mxu0
        %v1491 = vadd.f32 0.0, %v1490
        %v1492 = vpop.f32.mrb[0].mxu0
        %v1493 = vpop.f32.mrb[0].mxu0
        %v1494 = vpop.f32.mrb[0].mxu0
        %1495 = vdwg.mxu0
        %v1496 = vpack.c.bf16 %v1491, %v1491
        %v1497 = vld [vmem:[%s6] sm:$0xf]
        %v1498 = vld [vmem:[%s6 + $0x4] sm:$0xf]
        %v1499 = vld [vmem:[%s6 + $0x8] sm:$0xf]
        %v1500 = vld [vmem:[%s6 + $0xc] sm:$0xf]
        %v1501 = vld [vmem:[%s6 + $0x10] sm:$0xf]
        %v1502 = vld [vmem:[%s6 + $0x14] sm:$0xf]
        %v1503 = vld [vmem:[%s6 + $0x18] sm:$0xf]
        %v1504 = vld [vmem:[%s6 + $0x1c] sm:$0xf]
        %v1505 = vld [vmem:[%s6 + $0x20] sm:$0xf]
        %v1506 = vld [vmem:[%s6 + $0x24] sm:$0xf]
        %v1507 = vld [vmem:[%s6 + $0x28] sm:$0xf]
        %v1508 = vld [vmem:[%s6 + $0x2c] sm:$0xf]
        %v1509 = vld [vmem:[%s6 + $0x30] sm:$0xf]
        %v1510 = vld [vmem:[%s6 + $0x34] sm:$0xf]
        %v1511 = vld [vmem:[%s6 + $0x38] sm:$0xf]
        %v1512 = vld [vmem:[%s6 + $0x3c] sm:$0xf]
        %v1513 = vld [vmem:[%s6 + $0x40] sm:$0xf]
        %v1514 = vld [vmem:[%s6 + $0x44] sm:$0xf]
        %v1515 = vld [vmem:[%s6 + $0x48] sm:$0xf]
        %v1516 = vld [vmem:[%s6 + $0x4c] sm:$0xf]
        %v1517 = vld [vmem:[%s6 + $0x50] sm:$0xf]
        %v1518 = vld [vmem:[%s6 + $0x54] sm:$0xf]
        %v1519 = vld [vmem:[%s6 + $0x58] sm:$0xf]
        %v1520 = vld [vmem:[%s6 + $0x5c] sm:$0xf]
        %v1521 = vld [vmem:[%s6 + $0x60] sm:$0xf]
        %v1522 = vld [vmem:[%s6 + $0x64] sm:$0xf]
        %v1523 = vld [vmem:[%s6 + $0x68] sm:$0xf]
        %v1524 = vld [vmem:[%s6 + $0x6c] sm:$0xf]
        %v1525 = vld [vmem:[%s6 + $0x70] sm:$0xf]
        %v1526 = vld [vmem:[%s6 + $0x74] sm:$0xf]
        %v1527 = vld [vmem:[%s6 + $0x78] sm:$0xf]
        %v1528 = vld [vmem:[%s6 + $0x7c] sm:$0xf]
        %v1529 = vld [vmem:[%s6 + $0x80] sm:$0xf]
        %v1530 = vld [vmem:[%s6 + $0x84] sm:$0xf]
        %v1531 = vld [vmem:[%s6 + $0x88] sm:$0xf]
        %v1532 = vld [vmem:[%s6 + $0x8c] sm:$0xf]
        %v1533 = vld [vmem:[%s6 + $0x90] sm:$0xf]
        %v1534 = vld [vmem:[%s6 + $0x94] sm:$0xf]
        %v1535 = vld [vmem:[%s6 + $0x98] sm:$0xf]
        %v1536 = vld [vmem:[%s6 + $0x9c] sm:$0xf]
        %v1537 = vld [vmem:[%s6 + $0xa0] sm:$0xf]
        %v1538 = vld [vmem:[%s6 + $0xa4] sm:$0xf]
        %v1539 = vld [vmem:[%s6 + $0xa8] sm:$0xf]
        %v1540 = vld [vmem:[%s6 + $0xac] sm:$0xf]
        %v1541 = vld [vmem:[%s6 + $0xb0] sm:$0xf]
        %v1542 = vld [vmem:[%s6 + $0xb4] sm:$0xf]
        %v1543 = vld [vmem:[%s6 + $0xb8] sm:$0xf]
        %v1544 = vld [vmem:[%s6 + $0xbc] sm:$0xf]
        %v1545 = vld [vmem:[%s7] sm:$0x1]
        %v1547 = vlaneseq
        %v1548 = vshrl.u32 %v1547, 7
        %v1549 = vsub.s32 0, %v1548
        %v1550 = vrot.slane %v1545, %v1549
        %v1600 = vunpack.c.l.b16 %v1497
        %v1601 = vunpack.c.l.b16 %v1498
        %v1602 = vunpack.c.l.b16 %v1499
        %v1603 = vunpack.c.l.b16 %v1500
        %v1604 = vunpack.c.l.b16 %v1501
        %v1605 = vunpack.c.l.b16 %v1502
        %v1606 = vunpack.c.l.b16 %v1503
        %v1607 = vunpack.c.l.b16 %v1504
        %v1608 = vunpack.c.l.b16 %v1505
        %v1609 = vunpack.c.l.b16 %v1506
        %v1610 = vunpack.c.l.b16 %v1507
        %v1611 = vunpack.c.l.b16 %v1508
        %v1612 = vunpack.c.l.b16 %v1509
        %v1613 = vunpack.c.l.b16 %v1510
        %v1614 = vunpack.c.l.b16 %v1511
        %v1615 = vunpack.c.l.b16 %v1512
        %v1616 = vunpack.c.l.b16 %v1513
        %v1617 = vunpack.c.l.b16 %v1514
        %v1618 = vunpack.c.l.b16 %v1515
        %v1619 = vunpack.c.l.b16 %v1516
        %v1620 = vunpack.c.l.b16 %v1517
        %v1621 = vunpack.c.l.b16 %v1518
        %v1622 = vunpack.c.l.b16 %v1519
        %v1623 = vunpack.c.l.b16 %v1520
        %v1624 = vunpack.c.l.b16 %v1521
        %v1625 = vunpack.c.l.b16 %v1522
        %v1626 = vunpack.c.l.b16 %v1523
        %v1627 = vunpack.c.l.b16 %v1524
        %v1628 = vunpack.c.l.b16 %v1525
        %v1629 = vunpack.c.l.b16 %v1526
        %v1630 = vunpack.c.l.b16 %v1527
        %v1631 = vunpack.c.l.b16 %v1528
        %v1632 = vunpack.c.l.b16 %v1529
        %v1633 = vunpack.c.l.b16 %v1530
        %v1634 = vunpack.c.l.b16 %v1531
        %v1635 = vunpack.c.l.b16 %v1532
        %v1636 = vunpack.c.l.b16 %v1533
        %v1637 = vunpack.c.l.b16 %v1534
        %v1638 = vunpack.c.l.b16 %v1535
        %v1639 = vunpack.c.l.b16 %v1536
        %v1640 = vunpack.c.l.b16 %v1537
        %v1641 = vunpack.c.l.b16 %v1538
        %v1642 = vunpack.c.l.b16 %v1539
        %v1643 = vunpack.c.l.b16 %v1540
        %v1644 = vunpack.c.l.b16 %v1541
        %v1645 = vunpack.c.l.b16 %v1542
        %v1646 = vunpack.c.l.b16 %v1543
        %v1647 = vunpack.c.l.b16 %v1544
        %v1648 = vpack.c.b16 %v1601, %v1600
        %v1649 = vpack.c.b16 %v1603, %v1602
        %v1650 = vpack.c.b16 %v1605, %v1604
        %v1651 = vpack.c.b16 %v1607, %v1606
        %v1652 = vpack.c.b16 %v1609, %v1608
        %v1653 = vpack.c.b16 %v1611, %v1610
        %v1654 = vpack.c.b16 %v1613, %v1612
        %v1655 = vpack.c.b16 %v1615, %v1614
        %v1656 = vpack.c.b16 %v1617, %v1616
        %v1657 = vpack.c.b16 %v1619, %v1618
        %v1658 = vpack.c.b16 %v1621, %v1620
        %v1659 = vpack.c.b16 %v1623, %v1622
        %v1660 = vpack.c.b16 %v1625, %v1624
        %v1661 = vpack.c.b16 %v1627, %v1626
        %v1662 = vpack.c.b16 %v1629, %v1628
        %v1663 = vpack.c.b16 %v1631, %v1630
        %v1664 = vpack.c.b16 %v1633, %v1632
        %v1665 = vpack.c.b16 %v1635, %v1634
        %v1666 = vpack.c.b16 %v1637, %v1636
        %v1667 = vpack.c.b16 %v1639, %v1638
        %v1668 = vpack.c.b16 %v1641, %v1640
        %v1669 = vpack.c.b16 %v1643, %v1642
        %v1670 = vpack.c.b16 %v1645, %v1644
        %v1671 = vpack.c.b16 %v1647, %v1646
        %1696 = vmatprep.subr.bf16.mxu0 0
        %1697 = vmatpush1.bf16.msra.mxu0 %v1648
        %1698 = vmatprep.subr.bf16.mxu0 0
        %1699 = vmatpush1.bf16.msra.mxu0 %v1649
        %1700 = vmatprep.subr.bf16.mxu0 0
        %1701 = vmatpush1.bf16.msra.mxu0 %v1650
        %1702 = vmatprep.subr.bf16.mxu0 0
        %1703 = vmatpush1.bf16.msra.mxu0 %v1651
        %1704 = vmatprep.subr.bf16.mxu0 0
        %1705 = vmatpush1.bf16.msra.mxu0 %v1652
        %1706 = vmatprep.subr.bf16.mxu0 0
        %1707 = vmatpush1.bf16.msra.mxu0 %v1653
        %1708 = vmatprep.subr.bf16.mxu0 0
        %1709 = vmatpush1.bf16.msra.mxu0 %v1654
        %1710 = vmatprep.subr.bf16.mxu0 0
        %1711 = vmatpush1.bf16.msra.mxu0 %v1655
        %1712 = vmatprep.subr.bf16.mxu0 0
        %1713 = vmatpush1.bf16.msra.mxu0 %v1656
        %1714 = vmatprep.subr.bf16.mxu0 0
        %1715 = vmatpush1.bf16.msra.mxu0 %v1657
        %1716 = vmatprep.subr.bf16.mxu0 0
        %1717 = vmatpush1.bf16.msra.mxu0 %v1658
        %1718 = vmatprep.subr.bf16.mxu0 0
        %1719 = vmatpush1.bf16.msra.mxu0 %v1659
        %1720 = vmatprep.subr.bf16.mxu0 0
        %1721 = vmatpush1.bf16.msra.mxu0 %v1660
        %1722 = vmatprep.subr.bf16.mxu0 0
        %1723 = vmatpush1.bf16.msra.mxu0 %v1661
        %1724 = vmatprep.subr.bf16.mxu0 0
        %1725 = vmatpush1.bf16.msra.mxu0 %v1662
        %1726 = vmatprep.subr.bf16.mxu0 0
        %1727 = vmatpush1.bf16.msra.mxu0 %v1663
        %1728 = vmatprep.mubr.bf16.mxu0 %v1455
        %1729 = vmatmul.mubr.bf16.gmra.mrb[0].mxu0 %v1414
        %v1730 = vpop.f32.mrb[0].mxu0
        %v1731 = vadd.f32 %v1550, %v1730
        %v1732 = vpop.f32.mrb[0].mxu0
        %v1733 = vpop.f32.mrb[0].mxu0
        %v1734 = vpop.f32.mrb[0].mxu0
        %1735 = vdwg.mxu0
        %1736 = vmatprep.subr.bf16.mxu0 0
        %1737 = vmatpush1.bf16.msra.mxu0 %v1664
        %1738 = vmatprep.subr.bf16.mxu0 0
        %1739 = vmatpush1.bf16.msra.mxu0 %v1665
        %1740 = vmatprep.subr.bf16.mxu0 0
        %1741 = vmatpush1.bf16.msra.mxu0 %v1666
        %1742 = vmatprep.subr.bf16.mxu0 0
        %1743 = vmatpush1.bf16.msra.mxu0 %v1667
        %1744 = vmatprep.subr.bf16.mxu0 0
        %1745 = vmatpush1.bf16.msra.mxu0 %v1668
        %1746 = vmatprep.subr.bf16.mxu0 0
        %1747 = vmatpush1.bf16.msra.mxu0 %v1669
        %1748 = vmatprep.subr.bf16.mxu0 0
        %1749 = vmatpush1.bf16.msra.mxu0 %v1670
        %1750 = vmatprep.subr.bf16.mxu0 0
        %1751 = vmatpush1.bf16.msra.mxu0 %v1671
        %1752 = vmatprep.subr.bf16.mxu0 0
        %1753 = vmatpush1.bf16.msra.mxu0 0
        %1754 = vmatprep.subr.bf16.mxu0 0
        %1755 = vmatpush1.bf16.msra.mxu0 0
        %1756 = vmatprep.subr.bf16.mxu0 0
        %1757 = vmatpush1.bf16.msra.mxu0 0
        %1758 = vmatprep.subr.bf16.mxu0 0
        %1759 = vmatpush1.bf16.msra.mxu0 0
        %1760 = vmatprep.subr.bf16.mxu0 0
        %1761 = vmatpush1.bf16.msra.mxu0 0
        %1762 = vmatprep.subr.bf16.mxu0 0
        %1763 = vmatpush1.bf16.msra.mxu0 0
        %1764 = vmatprep.subr.bf16.mxu0 0
        %1765 = vmatpush1.bf16.msra.mxu0 0
        %1766 = vmatprep.subr.bf16.mxu0 0
        %1767 = vmatpush1.bf16.msra.mxu0 0
        %1768 = vmatprep.mubr.bf16.mxu0 0
        %1769 = vmatmul.mubr.bf16.gmra.mrb[0].mxu0 %v1496
        %v1770 = vpop.f32.mrb[0].mxu0
        %v1771 = vadd.f32 %v1731, %v1770
        %v1772 = vpop.f32.mrb[0].mxu0
        %v1773 = vpop.f32.mrb[0].mxu0
        %v1774 = vpop.f32.mrb[0].mxu0
        %1775 = vdwg.mxu0
        %v1776 = vmul.f32 %v1771, %v390
        %vm1777 = vcmask 523264
        %v1778 = vsel %vm1777, %v1776, 0.0
        %1779 = vadd.xlane.f32.xlu0 %v1778
        %v1780 = vpop.xlane.xlu0 %1779
        %v1781 = vrot.slane %v1780, 4
        %v1782 = vadd.f32 %v1780, %v1781
        %v1783 = vrot.slane %v1782, 2
        %v1784 = vadd.f32 %v1782, %v1783
        %v1785 = vrot.slane %v1784, 1
        %v1786 = vadd.f32 %v1784, %v1785
        %v1787 = vmul.f32 %v1776, %v1776
        %v1788 = vsel %vm1777, %v1787, 0.0
        %1789 = vadd.xlane.f32.xlu0 %v1788
        %v1790 = vpop.xlane.xlu0 %1789
        %v1791 = vrot.slane %v1790, 4
        %v1792 = vadd.f32 %v1790, %v1791
        %v1793 = vrot.slane %v1792, 2
        %v1794 = vadd.f32 %v1792, %v1793
        %v1795 = vrot.slane %v1794, 1
        %v1796 = vadd.f32 %v1794, %v1795
        %v1797 = vmul.f32 %v1786, 0.001953125
        %v1798 = vmul.f32 %v1797, 512.0
        %v1799 = vmul.f32 %v1798, %v1797
        %v1800 = vsub.f32 %v1796, %v1799
        %v1801 = vmul.f32 %v1800, 0.0019569471
        %v1802 = vmax.f32 %v1801, 0.0
        %v1803 = vrsqrt.pop %v1802
        %v1804 = vmul.f32 %v1802, %v1803
        %vm1805 = vcmp.eq.f32.partialorder %v1802, inf
        %v1806 = vsel %vm1805, %v1802, %v1804
        %vm1807 = vcmp.eq.f32.partialorder %v1802, 0.0
        %v1808 = vand.u32 %v1802, 2147483648
        %v1809 = vsel %vm1807, %v1808, %v1806
        %v1810 = vadd.f32 %v1809, 1e-05
        %v1811 = vrcp.pop %v1810
        %v1812 = vsub.f32 %v1776, %v1797
        %v1813 = vmul.f32 %v1812, %v1811
        %vm1814 = vcmp.lt.s32.totalorder %v336, 8
        %v1815 = vsel %vm1814, 1, 0
        %vm1816 = vcmp.eq.s32.totalorder %v1815, 1
        %v1817 = vsel %vm1816, %v1813, -inf
        %v1818 = vsel %vm1777, %v1817, -inf
        %v1819 = vrot.slane %v1818, 4
        %v1820 = vmax.f32 %v1818, %v1819
        %v1821 = vrot.slane %v1820, 2
        %v1822 = vmax.f32 %v1820, %v1821
        %v1823 = vrot.slane %v1822, 1
        %v1824 = vmax.f32 %v1822, %v1823
        %vm1825 = vcmask 516096
        %1826 = vst.msk [vmem:[%s323] sm:$0x1] %vm1825, %v1824
        %s1827 = sand.u32 %s209, 1
        %s1828 = scalar_lea.sflag [#allocation4], %s1827
        %s1829 = sand.u32 %s209, 1
        %s1830 = scalar_lea.vmem [#allocation5], %s1829
        // Predicated region
        $region57: #{tpu_custom_call.1} parent=51 // pred_check
          %p1831 = pneg %p219
        $region58: #{tpu_custom_call.1} parent=51 // pred_check_branch
          %1833 = sbr.rel (%p1831) target = $region60
        $region59: #{tpu_custom_call.1} parent=51 // pred_region
          %s1835 = ssub.s32 16, 16
          %1836 = vsyncadd %s1828, %s1835
          %s1837 = smul.addr %s23, 16
          %s1838 = scalar_lea.hbm %s8, %s1837
          %s1840 = sshll.u32 %s1830, 4
          %s1841 = int_to_ptr.vmem [resolvable:$true] %s1840
          %1843 = dma.vmem_to_hbm [thread:$0]  %s1841, 16, %s1838, %s1828
        $region60: #{tpu_custom_call.1} parent=51 // pred_fallthru
          _
      $region52: #{tpu_custom_call.1} parent=5 // pred_fallthru
        _
      %p1844 = scmp.le.s32.totalorder 2, %s18
      // Predicated region
      $region61: #{tpu_custom_call.1} parent=5 // pred_check
        %p1845 = pneg %p1844
      $region62: #{tpu_custom_call.1} parent=5 // pred_check_branch
        %1847 = sbr.rel (%p1845) target = $region64
      $region63: #{tpu_custom_call.1} parent=5 // pred_region
        %s1848 = ssub.s32 %s18, 2
        // Predicated region
        $region65: #{tpu_custom_call.1} parent=63 // pred_check
          %p1849 = pneg %p225
        $region66: #{tpu_custom_call.1} parent=63 // pred_check_branch
          %1851 = sbr.rel (%p1849) target = $region68
        $region67: #{tpu_custom_call.1} parent=63 // pred_region
          %s1852 = sand.u32 %s210, 1
          %s1853 = scalar_lea.sflag [#allocation4], %s1852
          %s1854 = sand.u32 %s210, 1
          %s1855 = scalar_lea.vmem [#allocation5], %s1854
          %1856 = dma.done %s1853, 16
        $region68: #{tpu_custom_call.1} parent=63 // pred_fallthru
          _
      $region64: #{tpu_custom_call.1} parent=5 // pred_fallthru
        _
    $region6: #{tpu_custom_call.1} parent=1 // loop_footer
      %s22 = sadd.s32 1, %s18
    $region7: #{tpu_custom_call.1} parent=1 // loop_footer_branch
      %17 = sbr.rel target = $region3
    $region8: #{tpu_custom_call.1} parent=1 // loop_exit
      _
    %1857 = vsyncpa [#allocation3], 1
    %s1858 = scalar_lea.sflag [#allocation3], 1
    %1859 = vsyncpa %s1858, 1
    %1860 = vsyncpa [#allocation4], 1
    %s1861 = scalar_lea.sflag [#allocation4], 1
    %1862 = vsyncpa %s1861, 1

</llo_original>
